<compile_context>
chip_gen: v7x
topology: tpu7x:2x2x1
jax: 0.10.0
libtpu: 0.0.40
codegen_flags: <defaults>
</compile_context>

<pallas_src>
import functools

import jax
import jax.numpy as jnp
from jax.experimental import pallas as pl
from jax.experimental.pallas import tpu as pltpu


def _wgan_gp_loss_kernel(data_ref, z_ref, r_ref, wg_ref, bg_ref,
                         w1_ref, b1_ref, w2_ref, g_ref, b2_ref,
                         out_ref, *, coef):
    data = data_ref[...]          # (B, D) f32
    z = z_ref[...]                # (B, L) f32
    r = r_ref[...]                # (B, 1) f32
    wg = wg_ref[...]              # (L, D)
    bg = bg_ref[...]              # (1, D)
    w1 = w1_ref[...]              # (D, F)
    b1 = b1_ref[...]              # (1, F)
    w2 = w2_ref[...]              # (1, F)
    g = g_ref[...]                # (F, F) = W1^T @ W1  (precomputed Gram matrix)
    b2 = b2_ref[0, 0]             # scalar (SMEM)

    # ---- generator: fake = tanh(z @ Wg + bg) ----
    fake = jnp.tanh(jnp.dot(z, wg, preferred_element_type=jnp.float32) + bg)

    # ---- discriminate(fake) / discriminate(data) ----
    # Two small dots against the VMEM-resident w1; no concat / sublane slicing.
    h_fake = jnp.dot(fake, w1, preferred_element_type=jnp.float32) + b1  # (B, F)
    h_data = jnp.dot(data, w1, preferred_element_type=jnp.float32) + b1  # (B, F)
    score_fake = jnp.sum(jnp.maximum(h_fake, 0.0) * w2, axis=1, keepdims=True) + b2
    score_data = jnp.sum(jnp.maximum(h_data, 0.0) * w2, axis=1, keepdims=True) + b2
    dist = jnp.mean(score_fake - score_data)                             # D(fake)-D(data)

    # ---- gradient penalty on interpolates ----
    # extractor pre-activation is affine in x, so with inter = r*data + (1-r)*fake:
    #   h_inter = r*h_data + (1-r)*h_fake   (no third big matmul needed)
    h_inter = r * h_data + (1.0 - r) * h_fake                            # (B, F)
    gvec = jnp.where(h_inter > 0.0, w2, 0.0)                             # relu' * w2
    # ||gvec @ W1^T||^2 = gvec @ (W1^T W1) @ gvec^T  -> quadratic form with G (F,F)
    gg = jnp.dot(gvec, g, preferred_element_type=jnp.float32)            # (B, F)
    sq = jnp.sum(gvec * gg, axis=1, keepdims=True)                       # (B, 1)
    gnorm = jnp.sqrt(sq)
    gp = jnp.mean((gnorm - 1.0) ** 2)

    out_ref[0, 0] = dist + coef * gp


def disc_wgan_gp_loss(data_flat, z, r, wg, bg, w1, b1, w2, b2, g, coef=10.0):
    """All arrays small -> single grid point, whole tensors resident in VMEM.

    `g` = w1.T @ w1 must be precomputed once per weight update (persistent
    parameter); it is NOT recomputed per loss evaluation.
    """
    kernel = functools.partial(_wgan_gp_loss_kernel, coef=float(coef))
    vmem = pl.BlockSpec(memory_space=pltpu.MemorySpace.VMEM)
    smem = pl.BlockSpec(memory_space=pltpu.MemorySpace.SMEM)
    # FLOPs: gen (B,L)@(L,D) + 2x (B,D)@(D,F) + (B,F)@(F,F) + elementwise ~ 1.5e6
    # Bytes: data 8K + z 0.25K + wg 128K + bg 4K + w1 512K + g 64K + small ~ 0.73e6
    # Transcendentals: tanh B*D + sqrt B ~ 2e3
    cost = pl.CostEstimate(flops=1_500_000, transcendentals=2_100,
                           bytes_accessed=740_000)
    out = pl.pallas_call(
        kernel,
        out_shape=jax.ShapeDtypeStruct((1, 1), jnp.float32),
        in_specs=[vmem,   # data
                  vmem,   # z
                  vmem,   # r
                  vmem,   # wg
                  vmem,   # bg
                  vmem,   # w1
                  vmem,   # b1
                  vmem,   # w2
                  vmem,   # g (Gram matrix, 128x128)
                  smem],  # b2 (scalar -> SMEM, avoids an (8,128)-padded VMEM tile)
        out_specs=smem,
        cost_estimate=cost,
    )(data_flat, z, r, wg, bg, w1, b1, w2, g, b2)
    return out[0, 0]


def ref_loss(data_flat, z, r, wg, bg, w1, b1, w2, b2, coef=10.0):
    """Pure-JAX reference (same math as the PyTorch module, autograd penalty)."""
    fake = jnp.tanh(z @ wg + bg)

    def disc(x):
        h = x @ w1 + b1
        return jnp.sum(jnp.maximum(h, 0.0) * w2, axis=1) + b2[0, 0]

    dist = jnp.mean(disc(fake) - disc(data_flat))
    inter = r * data_flat + (1.0 - r) * fake
    grad = jax.vmap(jax.grad(lambda x: disc(x[None, :])[0]))(inter)
    gp = jnp.mean((jnp.linalg.norm(grad, axis=1) - 1.0) ** 2)
    return dist + coef * gp


if __name__ == "__main__":
    B, C, H, W = 2, 4, 16, 16         # NCHW data, as in the PyTorch module
    D = C * H * W                     # flattened feature dim = 1024
    L = 32                            # dim_latent
    F = 128                           # extractor feature dim
    COEF = 10.0                       # penalty_coef default

    key = jax.random.PRNGKey(0)
    k_data, k_z, k_r, k_wg, k_w1, k_w2, k_b1 = jax.random.split(key, 7)

    data_nchw = jax.random.normal(k_data, (B, C, H, W), jnp.float32)
    data_flat = data_nchw.reshape(B, D)          # NCHW flattened row-major

    # randn(B, dim_latent) for the generator, rand(B, 1, 1, 1) for interpolation
    # (RNG is drawn host-side with jax.random; torch RNG has no in-kernel analog)
    z = jax.random.normal(k_z, (B, L), jnp.float32)
    r = jax.random.uniform(k_r, (B, 1), jnp.float32)   # broadcasts over features

    # Deterministic synthetic parameters (no checkpoint loading)
    wg = 0.05 * jax.random.normal(k_wg, (L, D), jnp.float32)
    bg = jnp.zeros((1, D), jnp.float32)
    w1 = 0.05 * jax.random.normal(k_w1, (D, F), jnp.float32)
    b1 = 0.01 * jax.random.normal(k_b1, (1, F), jnp.float32)
    w2 = 0.1 * jax.random.normal(k_w2, (1, F), jnp.float32)
    b2 = jnp.zeros((1, 1), jnp.float32)

    # Persistent Gram matrix: computed once per weight update, NOT per call.
    gram = jnp.dot(w1.T, w1)                      # (F, F) = 64 KiB

    loss = disc_wgan_gp_loss(data_flat, z, r, wg, bg, w1, b1, w2, b2, gram, COEF)
    loss = jax.block_until_ready(loss)

    expected = ref_loss(data_flat, z, r, wg, bg, w1, b1, w2, b2, COEF)
    assert jnp.allclose(loss, expected, rtol=1e-4, atol=1e-4), (loss, expected)

    print("KERNEL_OK")
</pallas_src>

<mosaic_0001>
module attributes {stable_mosaic.version = 11 : i64} {
  func.func @_wgan_gp_loss_kernel(%arg0: memref<2x1024xf32, #tpu.memory_space<vmem>>, %arg1: memref<2x32xf32, #tpu.memory_space<vmem>>, %arg2: memref<2x1xf32, #tpu.memory_space<vmem>>, %arg3: memref<32x1024xf32, #tpu.memory_space<vmem>>, %arg4: memref<1x1024xf32, #tpu.memory_space<vmem>>, %arg5: memref<1024x128xf32, #tpu.memory_space<vmem>>, %arg6: memref<1x128xf32, #tpu.memory_space<vmem>>, %arg7: memref<1x128xf32, #tpu.memory_space<vmem>>, %arg8: memref<128x128xf32, #tpu.memory_space<vmem>>, %arg9: memref<1x1xf32, #tpu.memory_space<smem>>, %arg10: memref<1x1xf32, #tpu.memory_space<smem>>) attributes {dimension_semantics = [], scalar_prefetch = 0 : i64, scratch_operands = 0 : i64, tpu.core_type = #tpu.core_type<tc>} {
    %c0 = arith.constant 0 : index
    %c0_0 = arith.constant 0 : index
    %0 = vector.load %arg0[%c0, %c0_0] : memref<2x1024xf32, #tpu.memory_space<vmem>>, vector<2x1024xf32>
    %c0_1 = arith.constant 0 : index
    %c0_2 = arith.constant 0 : index
    %1 = vector.load %arg1[%c0_1, %c0_2] : memref<2x32xf32, #tpu.memory_space<vmem>>, vector<2x32xf32>
    %c0_3 = arith.constant 0 : index
    %c0_4 = arith.constant 0 : index
    %2 = vector.load %arg2[%c0_3, %c0_4] : memref<2x1xf32, #tpu.memory_space<vmem>>, vector<2x1xf32>
    %c0_5 = arith.constant 0 : index
    %c0_6 = arith.constant 0 : index
    %3 = vector.load %arg3[%c0_5, %c0_6] : memref<32x1024xf32, #tpu.memory_space<vmem>>, vector<32x1024xf32>
    %c0_7 = arith.constant 0 : index
    %c0_8 = arith.constant 0 : index
    %4 = vector.load %arg4[%c0_7, %c0_8] : memref<1x1024xf32, #tpu.memory_space<vmem>>, vector<1x1024xf32>
    %c0_9 = arith.constant 0 : index
    %c0_10 = arith.constant 0 : index
    %5 = vector.load %arg5[%c0_9, %c0_10] : memref<1024x128xf32, #tpu.memory_space<vmem>>, vector<1024x128xf32>
    %c0_11 = arith.constant 0 : index
    %c0_12 = arith.constant 0 : index
    %6 = vector.load %arg6[%c0_11, %c0_12] : memref<1x128xf32, #tpu.memory_space<vmem>>, vector<1x128xf32>
    %c0_13 = arith.constant 0 : index
    %c0_14 = arith.constant 0 : index
    %7 = vector.load %arg7[%c0_13, %c0_14] : memref<1x128xf32, #tpu.memory_space<vmem>>, vector<1x128xf32>
    %c0_15 = arith.constant 0 : index
    %c0_16 = arith.constant 0 : index
    %8 = vector.load %arg8[%c0_15, %c0_16] : memref<128x128xf32, #tpu.memory_space<vmem>>, vector<128x128xf32>
    %c0_17 = arith.constant 0 : index
    %c0_18 = arith.constant 0 : index
    %9 = memref.load %arg9[%c0_17, %c0_18] : memref<1x1xf32, #tpu.memory_space<smem>>
    %cst = arith.constant dense<0.000000e+00> : vector<2x1024xf32>
    %10 = tpu.matmul %1, %3, %cst {dimension_numbers = #tpu.dot_dimension_numbers<[1], [0], [0], [1], [0, 0, 1, 1], [], []>} : vector<2x32xf32>, vector<32x1024xf32>, vector<2x1024xf32> -> vector<2x1024xf32>
    %11 = vector.broadcast %4 : vector<1x1024xf32> to vector<2x1024xf32>
    %12 = arith.addf %10, %11 : vector<2x1024xf32>
    %13 = math.tanh %12 : vector<2x1024xf32>
    %cst_19 = arith.constant dense<0.000000e+00> : vector<2x128xf32>
    %14 = tpu.matmul %13, %5, %cst_19 {dimension_numbers = #tpu.dot_dimension_numbers<[1], [0], [0], [1], [0, 0, 1, 1], [], []>} : vector<2x1024xf32>, vector<1024x128xf32>, vector<2x128xf32> -> vector<2x128xf32>
    %15 = vector.broadcast %6 : vector<1x128xf32> to vector<2x128xf32>
    %16 = arith.addf %14, %15 : vector<2x128xf32>
    %cst_20 = arith.constant dense<0.000000e+00> : vector<2x128xf32>
    %17 = tpu.matmul %0, %5, %cst_20 {dimension_numbers = #tpu.dot_dimension_numbers<[1], [0], [0], [1], [0, 0, 1, 1], [], []>} : vector<2x1024xf32>, vector<1024x128xf32>, vector<2x128xf32> -> vector<2x128xf32>
    %18 = vector.broadcast %6 : vector<1x128xf32> to vector<2x128xf32>
    %19 = arith.addf %17, %18 : vector<2x128xf32>
    %cst_21 = arith.constant 0.000000e+00 : f32
    %20 = vector.broadcast %cst_21 : f32 to vector<2x128xf32>
    %21 = arith.maximumf %16, %20 : vector<2x128xf32>
    %22 = vector.broadcast %7 : vector<1x128xf32> to vector<2x128xf32>
    %23 = arith.mulf %21, %22 : vector<2x128xf32>
    %cst_22 = arith.constant dense<0.000000e+00> : vector<2xf32>
    %24 = vector.multi_reduction <add>, %23, %cst_22 [1] : vector<2x128xf32> to vector<2xf32>
    %25 = vector.shape_cast %24 : vector<2xf32> to vector<2x1xf32>
    %26 = vector.broadcast %9 : f32 to vector<2x1xf32>
    %27 = arith.addf %25, %26 : vector<2x1xf32>
    %cst_23 = arith.constant 0.000000e+00 : f32
    %28 = vector.broadcast %cst_23 : f32 to vector<2x128xf32>
    %29 = arith.maximumf %19, %28 : vector<2x128xf32>
    %30 = vector.broadcast %7 : vector<1x128xf32> to vector<2x128xf32>
    %31 = arith.mulf %29, %30 : vector<2x128xf32>
    %cst_24 = arith.constant dense<0.000000e+00> : vector<2xf32>
    %32 = vector.multi_reduction <add>, %31, %cst_24 [1] : vector<2x128xf32> to vector<2xf32>
    %33 = vector.shape_cast %32 : vector<2xf32> to vector<2x1xf32>
    %34 = vector.broadcast %9 : f32 to vector<2x1xf32>
    %35 = arith.addf %33, %34 : vector<2x1xf32>
    %36 = arith.subf %27, %35 : vector<2x1xf32>
    %37 = vector.shape_cast %36 : vector<2x1xf32> to vector<1x2x1xf32>
    %cst_25 = arith.constant dense<0.000000e+00> : vector<1xf32>
    %38 = vector.multi_reduction <add>, %37, %cst_25 [1, 2] : vector<1x2x1xf32> to vector<1xf32>
    %39 = vector.shape_cast %38 : vector<1xf32> to vector<1x1x1xf32>
    %40 = vector.extract %39[0, 0, 0] : f32 from vector<1x1x1xf32>
    %cst_26 = arith.constant 2.000000e+00 : f32
    %41 = arith.divf %40, %cst_26 : f32
    %42 = vector.broadcast %2 : vector<2x1xf32> to vector<2x128xf32>
    %43 = arith.mulf %42, %19 : vector<2x128xf32>
    %cst_27 = arith.constant 1.000000e+00 : f32
    %44 = vector.broadcast %cst_27 : f32 to vector<2x1xf32>
    %45 = arith.subf %44, %2 : vector<2x1xf32>
    %46 = vector.broadcast %45 : vector<2x1xf32> to vector<2x128xf32>
    %47 = arith.mulf %46, %16 : vector<2x128xf32>
    %48 = arith.addf %43, %47 : vector<2x128xf32>
    %cst_28 = arith.constant 0.000000e+00 : f32
    %49 = vector.broadcast %cst_28 : f32 to vector<2x128xf32>
    %50 = arith.cmpf ogt, %48, %49 : vector<2x128xf32>
    %cst_29 = arith.constant 0.000000e+00 : f32
    %51 = vector.shape_cast %7 : vector<1x128xf32> to vector<1x128xf32>
    %52 = vector.broadcast %51 : vector<1x128xf32> to vector<2x128xf32>
    %53 = vector.broadcast %cst_29 : f32 to vector<2x128xf32>
    %54 = arith.select %50, %52, %53 : vector<2x128xi1>, vector<2x128xf32>
    %cst_30 = arith.constant dense<0.000000e+00> : vector<2x128xf32>
    %55 = tpu.matmul %54, %8, %cst_30 {dimension_numbers = #tpu.dot_dimension_numbers<[1], [0], [0], [1], [0, 0, 1, 1], [], []>} : vector<2x128xf32>, vector<128x128xf32>, vector<2x128xf32> -> vector<2x128xf32>
    %56 = arith.mulf %54, %55 : vector<2x128xf32>
    %cst_31 = arith.constant dense<0.000000e+00> : vector<2xf32>
    %57 = vector.multi_reduction <add>, %56, %cst_31 [1] : vector<2x128xf32> to vector<2xf32>
    %58 = vector.shape_cast %57 : vector<2xf32> to vector<2x1xf32>
    %59 = math.sqrt %58 : vector<2x1xf32>
    %cst_32 = arith.constant 1.000000e+00 : f32
    %60 = vector.broadcast %cst_32 : f32 to vector<2x1xf32>
    %61 = arith.subf %59, %60 : vector<2x1xf32>
    %62 = arith.mulf %61, %61 : vector<2x1xf32>
    %63 = vector.shape_cast %62 : vector<2x1xf32> to vector<1x2x1xf32>
    %cst_33 = arith.constant dense<0.000000e+00> : vector<1xf32>
    %64 = vector.multi_reduction <add>, %63, %cst_33 [1, 2] : vector<1x2x1xf32> to vector<1xf32>
    %65 = vector.shape_cast %64 : vector<1xf32> to vector<1x1x1xf32>
    %66 = vector.extract %65[0, 0, 0] : f32 from vector<1x1x1xf32>
    %cst_34 = arith.constant 2.000000e+00 : f32
    %67 = arith.divf %66, %cst_34 : f32
    %cst_35 = arith.constant 1.000000e+01 : f32
    %68 = arith.mulf %cst_35, %67 : f32
    %69 = arith.addf %41, %68 : f32
    %c0_36 = arith.constant 0 : index
    %c0_37 = arith.constant 0 : index
    %70 = memref.load %arg10[%c0_36, %c0_37] : memref<1x1xf32, #tpu.memory_space<smem>>
    memref.store %69, %arg10[%c0_36, %c0_37] : memref<1x1xf32, #tpu.memory_space<smem>>
    return
  }
}

</mosaic_0001>

<llo_original>
// kernel: tpu_custom_call.1
$region0: #{tpu_custom_call.1}
  #allocation0 [shape = 'u32[]', space=smem, size = 0x4, offset = 0x4, fixed_abs, tag = 'smem constant byte address 0x4 - core index']
  #allocation1 [shape = 'u32[144,128]{1,0:T(1,128)}', space=vmem, size = 0x12000, scoped, tag = 'internal scratch']
  #allocation2 [shape = 'f32[1,1]{1,0:T(1,128)S(6)}', space=smem, size = 0x200, scoped, tag = 'scoped memory for tpu_custom_call.1']
  %s0 = inlined_call_operand.hbm [shape: f32[2,1024], index: 0, kind: input, shape index: {}]
  %s1 = inlined_call_operand.vmem [shape: f32[2,32], index: 1, kind: input, shape index: {}]
  %s2 = inlined_call_operand.vmem [shape: f32[2,1], index: 2, kind: input, shape index: {}]
  %s3 = inlined_call_operand.hbm [shape: f32[32,1024], index: 3, kind: input, shape index: {}]
  %s4 = inlined_call_operand.vmem [shape: f32[1,1024], index: 4, kind: input, shape index: {}]
  %s5 = inlined_call_operand.hbm [shape: f32[1024,128], index: 5, kind: input, shape index: {}]
  %s6 = inlined_call_operand.vmem [shape: f32[1,128], index: 6, kind: input, shape index: {}]
  %s7 = inlined_call_operand.vmem [shape: f32[1,128], index: 7, kind: input, shape index: {}]
  %s8 = inlined_call_operand.hbm [shape: f32[128,128], index: 8, kind: input, shape index: {}]
  %s9 = inlined_call_operand.<no memory space> [shape: f32[1,1], index: 9, kind: input, shape index: {}]
  %s10 = inlined_call_operand.hbm [shape: f32[1,1], index: 10, kind: output, shape index: {}]
  %s11 = sld [smem:[#allocation0]]
  $region66: #{tpu_custom_call.1} parent=0
    _
  %s13 = ssub.s32 1, %s11
  %s14 = scalar_select 0, %s13, %s11
  %15 = sst [smem:[#allocation2]] %s9
  $region1: #{tpu_custom_call.1} parent=0
    #allocation3 [shape = 'u8[8192]{0}', space=vmem, size = 0x2000, scoped, tag = 'input window, operand 0, single buffered']
    #allocation4 [shape = 's32[1]{0}', space=sflag, size = 0x4, scoped, tag = 'scoped memory for tpu_custom_call.1']
    #allocation5 [shape = 's32[1]{0}', space=sflag, size = 0x4, scoped, tag = 'scoped memory for tpu_custom_call.1']
    #allocation6 [shape = 'u8[131072]{0}', space=vmem, size = 0x20000, scoped, tag = 'input window, operand 3, single buffered']
    #allocation7 [shape = 's32[1]{0}', space=sflag, size = 0x4, scoped, tag = 'scoped memory for tpu_custom_call.1']
    #allocation8 [shape = 'u8[524288]{0}', space=vmem, size = 0x80000, scoped, tag = 'input window, operand 5, single buffered']
    #allocation9 [shape = 'u8[65536]{0}', space=vmem, size = 0x10000, scoped, tag = 'input window, operand 8, single buffered']
    #allocation10 [shape = 's32[1]{0}', space=sflag, size = 0x4, scoped, tag = 'scoped memory for tpu_custom_call.1']
    #allocation11 [shape = 'u8[512]{0}', space=smem, size = 0x200, scoped, tag = 'output window, operand 0, single buffered']
    %16 = vsyncpa [#allocation4], 0
    %17 = vsyncpa [#allocation7], 0
    %18 = vsyncpa [#allocation10], 0
    %19 = vsyncpa [#allocation5], 0
    // Predicated region
    $region2: #{tpu_custom_call.1} parent=1 // pred_check
      _
    $region3: #{tpu_custom_call.1} parent=1 // pred_check_branch
      %21 = sbr.rel (0) target = $region5
    $region4: #{tpu_custom_call.1} parent=1 // pred_region
      %s23 = ssub.s32 256, 256
      %24 = vsyncadd [#allocation4], %s23
      %s26 = sshll.u32 [#allocation3], 4
      %s27 = int_to_ptr.vmem [resolvable:$true] %s26
      %29 = dma.hbm_to_vmem [thread:$0]  %s0, 256, %s27, [#allocation4]
    $region5: #{tpu_custom_call.1} parent=1 // pred_fallthru
      _
    // Predicated region
    $region6: #{tpu_custom_call.1} parent=1 // pred_check
      _
    $region7: #{tpu_custom_call.1} parent=1 // pred_check_branch
      %31 = sbr.rel (0) target = $region9
    $region8: #{tpu_custom_call.1} parent=1 // pred_region
      _
    $region9: #{tpu_custom_call.1} parent=1 // pred_fallthru
      _
    // Predicated region
    $region10: #{tpu_custom_call.1} parent=1 // pred_check
      _
    $region11: #{tpu_custom_call.1} parent=1 // pred_check_branch
      %33 = sbr.rel (0) target = $region13
    $region12: #{tpu_custom_call.1} parent=1 // pred_region
      _
    $region13: #{tpu_custom_call.1} parent=1 // pred_fallthru
      _
    // Predicated region
    $region14: #{tpu_custom_call.1} parent=1 // pred_check
      _
    $region15: #{tpu_custom_call.1} parent=1 // pred_check_branch
      %35 = sbr.rel (0) target = $region17
    $region16: #{tpu_custom_call.1} parent=1 // pred_region
      %s37 = ssub.s32 4096, 4096
      %38 = vsyncadd [#allocation7], %s37
      %s39 = sshll.u32 [#allocation6], 4
      %s40 = int_to_ptr.vmem [resolvable:$true] %s39
      %45 = dma.hbm_to_vmem [thread:$0]  %s3, 4096, %s40, [#allocation7], 1024, 1024, 64
    $region17: #{tpu_custom_call.1} parent=1 // pred_fallthru
      _
    // Predicated region
    $region18: #{tpu_custom_call.1} parent=1 // pred_check
      _
    $region19: #{tpu_custom_call.1} parent=1 // pred_check_branch
      %47 = sbr.rel (0) target = $region21
    $region20: #{tpu_custom_call.1} parent=1 // pred_region
      _
    $region21: #{tpu_custom_call.1} parent=1 // pred_fallthru
      _
    // Predicated region
    $region22: #{tpu_custom_call.1} parent=1 // pred_check
      _
    $region23: #{tpu_custom_call.1} parent=1 // pred_check_branch
      %49 = sbr.rel (0) target = $region25
    $region24: #{tpu_custom_call.1} parent=1 // pred_region
      %s51 = ssub.s32 16384, 16384
      %52 = vsyncadd [#allocation7], %s51
      %s53 = sshll.u32 [#allocation8], 4
      %s54 = int_to_ptr.vmem [resolvable:$true] %s53
      %59 = dma.hbm_to_vmem [thread:$0]  %s5, 16384, %s54, [#allocation7], 128, 128, 8
    $region25: #{tpu_custom_call.1} parent=1 // pred_fallthru
      _
    // Predicated region
    $region26: #{tpu_custom_call.1} parent=1 // pred_check
      _
    $region27: #{tpu_custom_call.1} parent=1 // pred_check_branch
      %61 = sbr.rel (0) target = $region29
    $region28: #{tpu_custom_call.1} parent=1 // pred_region
      _
    $region29: #{tpu_custom_call.1} parent=1 // pred_fallthru
      _
    // Predicated region
    $region30: #{tpu_custom_call.1} parent=1 // pred_check
      _
    $region31: #{tpu_custom_call.1} parent=1 // pred_check_branch
      %63 = sbr.rel (0) target = $region33
    $region32: #{tpu_custom_call.1} parent=1 // pred_region
      _
    $region33: #{tpu_custom_call.1} parent=1 // pred_fallthru
      _
    // Predicated region
    $region34: #{tpu_custom_call.1} parent=1 // pred_check
      _
    $region35: #{tpu_custom_call.1} parent=1 // pred_check_branch
      %65 = sbr.rel (0) target = $region37
    $region36: #{tpu_custom_call.1} parent=1 // pred_region
      %s67 = ssub.s32 2048, 2048
      %68 = vsyncadd [#allocation10], %s67
      %s69 = sshll.u32 [#allocation9], 4
      %s70 = int_to_ptr.vmem [resolvable:$true] %s69
      %75 = dma.hbm_to_vmem [thread:$0]  %s8, 2048, %s70, [#allocation10], 128, 128, 8
    $region37: #{tpu_custom_call.1} parent=1 // pred_fallthru
      _
    // Predicated region
    $region38: #{tpu_custom_call.1} parent=1 // pred_check
      _
    $region39: #{tpu_custom_call.1} parent=1 // pred_check_branch
      %77 = sbr.rel (0) target = $region41
    $region40: #{tpu_custom_call.1} parent=1 // pred_region
      _
    $region41: #{tpu_custom_call.1} parent=1 // pred_fallthru
      _
    // Predicated region
    $region42: #{tpu_custom_call.1} parent=1 // pred_check
      _
    $region43: #{tpu_custom_call.1} parent=1 // pred_check_branch
      %79 = sbr.rel (0) target = $region45
    $region44: #{tpu_custom_call.1} parent=1 // pred_region
      %80 = dma.done [#allocation4], 256
    $region45: #{tpu_custom_call.1} parent=1 // pred_fallthru
      _
    // Predicated region
    $region46: #{tpu_custom_call.1} parent=1 // pred_check
      _
    $region47: #{tpu_custom_call.1} parent=1 // pred_check_branch
      %82 = sbr.rel (0) target = $region49
    $region48: #{tpu_custom_call.1} parent=1 // pred_region
      %83 = dma.done [#allocation7], 4096
    $region49: #{tpu_custom_call.1} parent=1 // pred_fallthru
      _
    // Predicated region
    $region50: #{tpu_custom_call.1} parent=1 // pred_check
      _
    $region51: #{tpu_custom_call.1} parent=1 // pred_check_branch
      %85 = sbr.rel (0) target = $region53
    $region52: #{tpu_custom_call.1} parent=1 // pred_region
      %86 = dma.done [#allocation7], 16384
    $region53: #{tpu_custom_call.1} parent=1 // pred_fallthru
      _
    // Predicated region
    $region54: #{tpu_custom_call.1} parent=1 // pred_check
      _
    $region55: #{tpu_custom_call.1} parent=1 // pred_check_branch
      %88 = sbr.rel (0) target = $region57
    $region56: #{tpu_custom_call.1} parent=1 // pred_region
      %89 = dma.done [#allocation10], 2048
    $region57: #{tpu_custom_call.1} parent=1 // pred_fallthru
      _
    %v90 = vld [vmem:[#allocation3] sm:$0xff]
    %v91 = vld [vmem:[#allocation3 + $0x8] sm:$0xff]
    %v92 = vld [vmem:[%s1] sm:$0x3]
    %v93 = vld [vmem:[%s2] sm:$0x3]
    %v94 = vld [vmem:[#allocation6] sm:$0xff]
    %v95 = vld [vmem:[#allocation6 + $0x8] sm:$0xff]
    %v96 = vld [vmem:[#allocation6 + $0x10] sm:$0xff]
    %v97 = vld [vmem:[#allocation6 + $0x18] sm:$0xff]
    %v98 = vld [vmem:[#allocation6 + $0x20] sm:$0xff]
    %v99 = vld [vmem:[#allocation6 + $0x28] sm:$0xff]
    %v100 = vld [vmem:[#allocation6 + $0x30] sm:$0xff]
    %v101 = vld [vmem:[#allocation6 + $0x38] sm:$0xff]
    %v102 = vld [vmem:[#allocation6 + $0x40] sm:$0xff]
    %v103 = vld [vmem:[#allocation6 + $0x48] sm:$0xff]
    %v104 = vld [vmem:[#allocation6 + $0x50] sm:$0xff]
    %v105 = vld [vmem:[#allocation6 + $0x58] sm:$0xff]
    %v106 = vld [vmem:[#allocation6 + $0x60] sm:$0xff]
    %v107 = vld [vmem:[#allocation6 + $0x68] sm:$0xff]
    %v108 = vld [vmem:[#allocation6 + $0x70] sm:$0xff]
    %v109 = vld [vmem:[#allocation6 + $0x78] sm:$0xff]
    %v110 = vld [vmem:[#allocation6 + $0x80] sm:$0xff]
    %v111 = vld [vmem:[#allocation6 + $0x88] sm:$0xff]
    %v112 = vld [vmem:[#allocation6 + $0x90] sm:$0xff]
    %v113 = vld [vmem:[#allocation6 + $0x98] sm:$0xff]
    %v114 = vld [vmem:[#allocation6 + $0xa0] sm:$0xff]
    %v115 = vld [vmem:[#allocation6 + $0xa8] sm:$0xff]
    %v116 = vld [vmem:[#allocation6 + $0xb0] sm:$0xff]
    %v117 = vld [vmem:[#allocation6 + $0xb8] sm:$0xff]
    %v118 = vld [vmem:[#allocation6 + $0xc0] sm:$0xff]
    %v119 = vld [vmem:[#allocation6 + $0xc8] sm:$0xff]
    %v120 = vld [vmem:[#allocation6 + $0xd0] sm:$0xff]
    %v121 = vld [vmem:[#allocation6 + $0xd8] sm:$0xff]
    %v122 = vld [vmem:[#allocation6 + $0xe0] sm:$0xff]
    %v123 = vld [vmem:[#allocation6 + $0xe8] sm:$0xff]
    %v124 = vld [vmem:[#allocation6 + $0xf0] sm:$0xff]
    %v125 = vld [vmem:[#allocation6 + $0xf8] sm:$0xff]
    %v126 = vld [vmem:[%s4] sm:$0xff]
    %v127 = vld [vmem:[#allocation8] sm:$0xff]
    %v128 = vld [vmem:[#allocation8 + $0x8] sm:$0xff]
    %v129 = vld [vmem:[#allocation8 + $0x10] sm:$0xff]
    %v130 = vld [vmem:[#allocation8 + $0x18] sm:$0xff]
    %v131 = vld [vmem:[#allocation8 + $0x20] sm:$0xff]
    %v132 = vld [vmem:[#allocation8 + $0x28] sm:$0xff]
    %v133 = vld [vmem:[#allocation8 + $0x30] sm:$0xff]
    %v134 = vld [vmem:[#allocation8 + $0x38] sm:$0xff]
    %v135 = vld [vmem:[#allocation8 + $0x40] sm:$0xff]
    %v136 = vld [vmem:[#allocation8 + $0x48] sm:$0xff]
    %v137 = vld [vmem:[#allocation8 + $0x50] sm:$0xff]
    %v138 = vld [vmem:[#allocation8 + $0x58] sm:$0xff]
    %v139 = vld [vmem:[#allocation8 + $0x60] sm:$0xff]
    %v140 = vld [vmem:[#allocation8 + $0x68] sm:$0xff]
    %v141 = vld [vmem:[#allocation8 + $0x70] sm:$0xff]
    %v142 = vld [vmem:[#allocation8 + $0x78] sm:$0xff]
    %v143 = vld [vmem:[#allocation8 + $0x80] sm:$0xff]
    %v144 = vld [vmem:[#allocation8 + $0x88] sm:$0xff]
    %v145 = vld [vmem:[#allocation8 + $0x90] sm:$0xff]
    %v146 = vld [vmem:[#allocation8 + $0x98] sm:$0xff]
    %v147 = vld [vmem:[#allocation8 + $0xa0] sm:$0xff]
    %v148 = vld [vmem:[#allocation8 + $0xa8] sm:$0xff]
    %v149 = vld [vmem:[#allocation8 + $0xb0] sm:$0xff]
    %v150 = vld [vmem:[#allocation8 + $0xb8] sm:$0xff]
    %v151 = vld [vmem:[#allocation8 + $0xc0] sm:$0xff]
    %v152 = vld [vmem:[#allocation8 + $0xc8] sm:$0xff]
    %v153 = vld [vmem:[#allocation8 + $0xd0] sm:$0xff]
    %v154 = vld [vmem:[#allocation8 + $0xd8] sm:$0xff]
    %v155 = vld [vmem:[#allocation8 + $0xe0] sm:$0xff]
    %v156 = vld [vmem:[#allocation8 + $0xe8] sm:$0xff]
    %v157 = vld [vmem:[#allocation8 + $0xf0] sm:$0xff]
    %v158 = vld [vmem:[#allocation8 + $0xf8] sm:$0xff]
    %v159 = vld [vmem:[#allocation8 + $0x100] sm:$0xff]
    %v160 = vld [vmem:[#allocation8 + $0x108] sm:$0xff]
    %v161 = vld [vmem:[#allocation8 + $0x110] sm:$0xff]
    %v162 = vld [vmem:[#allocation8 + $0x118] sm:$0xff]
    %v163 = vld [vmem:[#allocation8 + $0x120] sm:$0xff]
    %v164 = vld [vmem:[#allocation8 + $0x128] sm:$0xff]
    %v165 = vld [vmem:[#allocation8 + $0x130] sm:$0xff]
    %v166 = vld [vmem:[#allocation8 + $0x138] sm:$0xff]
    %v167 = vld [vmem:[#allocation8 + $0x140] sm:$0xff]
    %v168 = vld [vmem:[#allocation8 + $0x148] sm:$0xff]
    %v169 = vld [vmem:[#allocation8 + $0x150] sm:$0xff]
    %v170 = vld [vmem:[#allocation8 + $0x158] sm:$0xff]
    %v171 = vld [vmem:[#allocation8 + $0x160] sm:$0xff]
    %v172 = vld [vmem:[#allocation8 + $0x168] sm:$0xff]
    %v173 = vld [vmem:[#allocation8 + $0x170] sm:$0xff]
    %v174 = vld [vmem:[#allocation8 + $0x178] sm:$0xff]
    %v175 = vld [vmem:[#allocation8 + $0x180] sm:$0xff]
    %v176 = vld [vmem:[#allocation8 + $0x188] sm:$0xff]
    %v177 = vld [vmem:[#allocation8 + $0x190] sm:$0xff]
    %v178 = vld [vmem:[#allocation8 + $0x198] sm:$0xff]
    %v179 = vld [vmem:[#allocation8 + $0x1a0] sm:$0xff]
    %v180 = vld [vmem:[#allocation8 + $0x1a8] sm:$0xff]
    %v181 = vld [vmem:[#allocation8 + $0x1b0] sm:$0xff]
    %v182 = vld [vmem:[#allocation8 + $0x1b8] sm:$0xff]
    %v183 = vld [vmem:[#allocation8 + $0x1c0] sm:$0xff]
    %v184 = vld [vmem:[#allocation8 + $0x1c8] sm:$0xff]
    %v185 = vld [vmem:[#allocation8 + $0x1d0] sm:$0xff]
    %v186 = vld [vmem:[#allocation8 + $0x1d8] sm:$0xff]
    %v187 = vld [vmem:[#allocation8 + $0x1e0] sm:$0xff]
    %v188 = vld [vmem:[#allocation8 + $0x1e8] sm:$0xff]
    %v189 = vld [vmem:[#allocation8 + $0x1f0] sm:$0xff]
    %v190 = vld [vmem:[#allocation8 + $0x1f8] sm:$0xff]
    %v191 = vld [vmem:[#allocation8 + $0x200] sm:$0xff]
    %v192 = vld [vmem:[#allocation8 + $0x208] sm:$0xff]
    %v193 = vld [vmem:[#allocation8 + $0x210] sm:$0xff]
    %v194 = vld [vmem:[#allocation8 + $0x218] sm:$0xff]
    %v195 = vld [vmem:[#allocation8 + $0x220] sm:$0xff]
    %v196 = vld [vmem:[#allocation8 + $0x228] sm:$0xff]
    %v197 = vld [vmem:[#allocation8 + $0x230] sm:$0xff]
    %v198 = vld [vmem:[#allocation8 + $0x238] sm:$0xff]
    %v199 = vld [vmem:[#allocation8 + $0x240] sm:$0xff]
    %v200 = vld [vmem:[#allocation8 + $0x248] sm:$0xff]
    %v201 = vld [vmem:[#allocation8 + $0x250] sm:$0xff]
    %v202 = vld [vmem:[#allocation8 + $0x258] sm:$0xff]
    %v203 = vld [vmem:[#allocation8 + $0x260] sm:$0xff]
    %v204 = vld [vmem:[#allocation8 + $0x268] sm:$0xff]
    %v205 = vld [vmem:[#allocation8 + $0x270] sm:$0xff]
    %v206 = vld [vmem:[#allocation8 + $0x278] sm:$0xff]
    %v207 = vld [vmem:[#allocation8 + $0x280] sm:$0xff]
    %v208 = vld [vmem:[#allocation8 + $0x288] sm:$0xff]
    %v209 = vld [vmem:[#allocation8 + $0x290] sm:$0xff]
    %v210 = vld [vmem:[#allocation8 + $0x298] sm:$0xff]
    %v211 = vld [vmem:[#allocation8 + $0x2a0] sm:$0xff]
    %v212 = vld [vmem:[#allocation8 + $0x2a8] sm:$0xff]
    %v213 = vld [vmem:[#allocation8 + $0x2b0] sm:$0xff]
    %v214 = vld [vmem:[#allocation8 + $0x2b8] sm:$0xff]
    %v215 = vld [vmem:[#allocation8 + $0x2c0] sm:$0xff]
    %v216 = vld [vmem:[#allocation8 + $0x2c8] sm:$0xff]
    %v217 = vld [vmem:[#allocation8 + $0x2d0] sm:$0xff]
    %v218 = vld [vmem:[#allocation8 + $0x2d8] sm:$0xff]
    %v219 = vld [vmem:[#allocation8 + $0x2e0] sm:$0xff]
    %v220 = vld [vmem:[#allocation8 + $0x2e8] sm:$0xff]
    %v221 = vld [vmem:[#allocation8 + $0x2f0] sm:$0xff]
    %v222 = vld [vmem:[#allocation8 + $0x2f8] sm:$0xff]
    %v223 = vld [vmem:[#allocation8 + $0x300] sm:$0xff]
    %v224 = vld [vmem:[#allocation8 + $0x308] sm:$0xff]
    %v225 = vld [vmem:[#allocation8 + $0x310] sm:$0xff]
    %v226 = vld [vmem:[#allocation8 + $0x318] sm:$0xff]
    %v227 = vld [vmem:[#allocation8 + $0x320] sm:$0xff]
    %v228 = vld [vmem:[#allocation8 + $0x328] sm:$0xff]
    %v229 = vld [vmem:[#allocation8 + $0x330] sm:$0xff]
    %v230 = vld [vmem:[#allocation8 + $0x338] sm:$0xff]
    %v231 = vld [vmem:[#allocation8 + $0x340] sm:$0xff]
    %v232 = vld [vmem:[#allocation8 + $0x348] sm:$0xff]
    %v233 = vld [vmem:[#allocation8 + $0x350] sm:$0xff]
    %v234 = vld [vmem:[#allocation8 + $0x358] sm:$0xff]
    %v235 = vld [vmem:[#allocation8 + $0x360] sm:$0xff]
    %v236 = vld [vmem:[#allocation8 + $0x368] sm:$0xff]
    %v237 = vld [vmem:[#allocation8 + $0x370] sm:$0xff]
    %v238 = vld [vmem:[#allocation8 + $0x378] sm:$0xff]
    %v239 = vld [vmem:[#allocation8 + $0x380] sm:$0xff]
    %v240 = vld [vmem:[#allocation8 + $0x388] sm:$0xff]
    %v241 = vld [vmem:[#allocation8 + $0x390] sm:$0xff]
    %v242 = vld [vmem:[#allocation8 + $0x398] sm:$0xff]
    %v243 = vld [vmem:[#allocation8 + $0x3a0] sm:$0xff]
    %v244 = vld [vmem:[#allocation8 + $0x3a8] sm:$0xff]
    %v245 = vld [vmem:[#allocation8 + $0x3b0] sm:$0xff]
    %v246 = vld [vmem:[#allocation8 + $0x3b8] sm:$0xff]
    %v247 = vld [vmem:[#allocation8 + $0x3c0] sm:$0xff]
    %v248 = vld [vmem:[#allocation8 + $0x3c8] sm:$0xff]
    %v249 = vld [vmem:[#allocation8 + $0x3d0] sm:$0xff]
    %v250 = vld [vmem:[#allocation8 + $0x3d8] sm:$0xff]
    %v251 = vld [vmem:[#allocation8 + $0x3e0] sm:$0xff]
    %v252 = vld [vmem:[#allocation8 + $0x3e8] sm:$0xff]
    %v253 = vld [vmem:[#allocation8 + $0x3f0] sm:$0xff]
    %v254 = vld [vmem:[#allocation8 + $0x3f8] sm:$0xff]
    %v255 = vld [vmem:[%s6] sm:$0x1]
    %v256 = vld [vmem:[%s7] sm:$0x1]
    %v257 = vld [vmem:[#allocation9] sm:$0xff]
    %v258 = vld [vmem:[#allocation9 + $0x8] sm:$0xff]
    %v259 = vld [vmem:[#allocation9 + $0x10] sm:$0xff]
    %v260 = vld [vmem:[#allocation9 + $0x18] sm:$0xff]
    %v261 = vld [vmem:[#allocation9 + $0x20] sm:$0xff]
    %v262 = vld [vmem:[#allocation9 + $0x28] sm:$0xff]
    %v263 = vld [vmem:[#allocation9 + $0x30] sm:$0xff]
    %v264 = vld [vmem:[#allocation9 + $0x38] sm:$0xff]
    %v265 = vld [vmem:[#allocation9 + $0x40] sm:$0xff]
    %v266 = vld [vmem:[#allocation9 + $0x48] sm:$0xff]
    %v267 = vld [vmem:[#allocation9 + $0x50] sm:$0xff]
    %v268 = vld [vmem:[#allocation9 + $0x58] sm:$0xff]
    %v269 = vld [vmem:[#allocation9 + $0x60] sm:$0xff]
    %v270 = vld [vmem:[#allocation9 + $0x68] sm:$0xff]
    %v271 = vld [vmem:[#allocation9 + $0x70] sm:$0xff]
    %v272 = vld [vmem:[#allocation9 + $0x78] sm:$0xff]
    %s273 = sld [smem:[#allocation2]]
    %v275 = vlaneseq
    %v276 = vshrl.u32 %v275, 7
    %v277 = vsub.s32 0, %v276
    %v278 = vrot.slane %v126, %v277
    %v279 = vlaneseq
    %v280 = vshrl.u32 %v279, 7
    %v281 = vsub.s32 1, %v280
    %v282 = vrot.slane %v126, %v281
    %v283 = vlaneseq
    %v284 = vshrl.u32 %v283, 7
    %v285 = vsub.s32 2, %v284
    %v286 = vrot.slane %v126, %v285
    %v287 = vlaneseq
    %v288 = vshrl.u32 %v287, 7
    %v289 = vsub.s32 3, %v288
    %v290 = vrot.slane %v126, %v289
    %v291 = vlaneseq
    %v292 = vshrl.u32 %v291, 7
    %v293 = vsub.s32 4, %v292
    %v294 = vrot.slane %v126, %v293
    %v295 = vlaneseq
    %v296 = vshrl.u32 %v295, 7
    %v297 = vsub.s32 5, %v296
    %v298 = vrot.slane %v126, %v297
    %v299 = vlaneseq
    %v300 = vshrl.u32 %v299, 7
    %v301 = vsub.s32 6, %v300
    %v302 = vrot.slane %v126, %v301
    %v303 = vlaneseq
    %v304 = vshrl.u32 %v303, 7
    %v305 = vsub.s32 7, %v304
    %v306 = vrot.slane %v126, %v305
    %vm315 = vcmask 261120
    %v317 = vsel %vm315, %v92, 0
    %319 = vmatprep.subr.mxu0 %v95
    %320 = vmatpush1.msra.mxu0 %v94
    %321 = vmatprep.subr.mxu0 %v103
    %322 = vmatpush1.msra.mxu0 %v102
    %323 = vmatprep.subr.mxu0 %v111
    %324 = vmatpush1.msra.mxu0 %v110
    %325 = vmatprep.subr.mxu0 %v119
    %326 = vmatpush1.msra.mxu0 %v118
    %327 = vmatprep.subr.mxu0 0.0
    %328 = vmatpush1.msra.mxu0 0.0
    %329 = vmatprep.subr.mxu0 0.0
    %330 = vmatpush1.msra.mxu0 0.0
    %331 = vmatprep.subr.mxu0 0.0
    %332 = vmatpush1.msra.mxu0 0.0
    %333 = vmatprep.subr.mxu0 0.0
    %334 = vmatpush1.msra.mxu0 0.0
    %335 = vmatprep.subr.mxu0 0.0
    %336 = vmatpush1.msra.mxu0 0.0
    %337 = vmatprep.subr.mxu0 0.0
    %338 = vmatpush1.msra.mxu0 0.0
    %339 = vmatprep.subr.mxu0 0.0
    %340 = vmatpush1.msra.mxu0 0.0
    %341 = vmatprep.subr.mxu0 0.0
    %342 = vmatpush1.msra.mxu0 0.0
    %343 = vmatprep.subr.mxu0 0.0
    %344 = vmatpush1.msra.mxu0 0.0
    %345 = vmatprep.subr.mxu0 0.0
    %346 = vmatpush1.msra.mxu0 0.0
    %347 = vmatprep.subr.mxu0 0.0
    %348 = vmatpush1.msra.mxu0 0.0
    %349 = vmatprep.subr.mxu0 0.0
    %350 = vmatpush1.msra.mxu0 0.0
    %351 = vmatprep.subr.mxu0 0.0
    %352 = vmatpush1.msra.mxu0 0.0
    %353 = vmatprep.subr.mxu0 0.0
    %354 = vmatpush1.msra.mxu0 0.0
    %355 = vmatprep.subr.mxu0 0.0
    %356 = vmatpush1.msra.mxu0 0.0
    %357 = vmatprep.subr.mxu0 0.0
    %358 = vmatpush1.msra.mxu0 0.0
    %359 = vmatprep.subr.mxu0 0.0
    %360 = vmatpush1.msra.mxu0 0.0
    %361 = vmatprep.subr.mxu0 0.0
    %362 = vmatpush1.msra.mxu0 0.0
    %363 = vmatprep.subr.mxu0 0.0
    %364 = vmatpush1.msra.mxu0 0.0
    %365 = vmatprep.subr.mxu0 0.0
    %366 = vmatpush1.msra.mxu0 0.0
    %367 = vmatprep.subr.mxu0 0.0
    %368 = vmatpush1.msra.mxu0 0.0
    %369 = vmatprep.subr.mxu0 0.0
    %370 = vmatpush1.msra.mxu0 0.0
    %371 = vmatprep.subr.mxu0 0.0
    %372 = vmatpush1.msra.mxu0 0.0
    %373 = vmatprep.subr.mxu0 0.0
    %374 = vmatpush1.msra.mxu0 0.0
    %375 = vmatprep.subr.mxu0 0.0
    %376 = vmatpush1.msra.mxu0 0.0
    %377 = vmatprep.subr.mxu0 0.0
    %378 = vmatpush1.msra.mxu0 0.0
    %379 = vmatprep.subr.mxu0 0.0
    %380 = vmatpush1.msra.mxu0 0.0
    %381 = vmatprep.subr.mxu0 0.0
    %382 = vmatpush1.msra.mxu0 0.0
    %383 = vmatprep.mubr.f32.mxu0 0.0
    %384 = vmatmul.mubr.f32.gmra.mrb[0].mxu0 %v317
    %v385 = vpop.f32.mrb[0].mxu0
    %v386 = vadd.f32 %v278, %v385
    %v387 = vpop.f32.mrb[0].mxu0
    %v388 = vadd.f32 %v282, %v387
    %389 = vdwg.mxu0
    %390 = vmatprep.subr.mxu0 %v97
    %391 = vmatpush1.msra.mxu0 %v96
    %392 = vmatprep.subr.mxu0 %v105
    %393 = vmatpush1.msra.mxu0 %v104
    %394 = vmatprep.subr.mxu0 %v113
    %395 = vmatpush1.msra.mxu0 %v112
    %396 = vmatprep.subr.mxu0 %v121
    %397 = vmatpush1.msra.mxu0 %v120
    %398 = vmatprep.subr.mxu0 0.0
    %399 = vmatpush1.msra.mxu0 0.0
    %400 = vmatprep.subr.mxu0 0.0
    %401 = vmatpush1.msra.mxu0 0.0
    %402 = vmatprep.subr.mxu0 0.0
    %403 = vmatpush1.msra.mxu0 0.0
    %404 = vmatprep.subr.mxu0 0.0
    %405 = vmatpush1.msra.mxu0 0.0
    %406 = vmatprep.subr.mxu0 0.0
    %407 = vmatpush1.msra.mxu0 0.0
    %408 = vmatprep.subr.mxu0 0.0
    %409 = vmatpush1.msra.mxu0 0.0
    %410 = vmatprep.subr.mxu0 0.0
    %411 = vmatpush1.msra.mxu0 0.0
    %412 = vmatprep.subr.mxu0 0.0
    %413 = vmatpush1.msra.mxu0 0.0
    %414 = vmatprep.subr.mxu0 0.0
    %415 = vmatpush1.msra.mxu0 0.0
    %416 = vmatprep.subr.mxu0 0.0
    %417 = vmatpush1.msra.mxu0 0.0
    %418 = vmatprep.subr.mxu0 0.0
    %419 = vmatpush1.msra.mxu0 0.0
    %420 = vmatprep.subr.mxu0 0.0
    %421 = vmatpush1.msra.mxu0 0.0
    %422 = vmatprep.subr.mxu0 0.0
    %423 = vmatpush1.msra.mxu0 0.0
    %424 = vmatprep.subr.mxu0 0.0
    %425 = vmatpush1.msra.mxu0 0.0
    %426 = vmatprep.subr.mxu0 0.0
    %427 = vmatpush1.msra.mxu0 0.0
    %428 = vmatprep.subr.mxu0 0.0
    %429 = vmatpush1.msra.mxu0 0.0
    %430 = vmatprep.subr.mxu0 0.0
    %431 = vmatpush1.msra.mxu0 0.0
    %432 = vmatprep.subr.mxu0 0.0
    %433 = vmatpush1.msra.mxu0 0.0
    %434 = vmatprep.subr.mxu0 0.0
    %435 = vmatpush1.msra.mxu0 0.0
    %436 = vmatprep.subr.mxu0 0.0
    %437 = vmatpush1.msra.mxu0 0.0
    %438 = vmatprep.subr.mxu0 0.0
    %439 = vmatpush1.msra.mxu0 0.0
    %440 = vmatprep.subr.mxu0 0.0
    %441 = vmatpush1.msra.mxu0 0.0
    %442 = vmatprep.subr.mxu0 0.0
    %443 = vmatpush1.msra.mxu0 0.0
    %444 = vmatprep.subr.mxu0 0.0
    %445 = vmatpush1.msra.mxu0 0.0
    %446 = vmatprep.subr.mxu0 0.0
    %447 = vmatpush1.msra.mxu0 0.0
    %448 = vmatprep.subr.mxu0 0.0
    %449 = vmatpush1.msra.mxu0 0.0
    %450 = vmatprep.subr.mxu0 0.0
    %451 = vmatpush1.msra.mxu0 0.0
    %452 = vmatprep.subr.mxu0 0.0
    %453 = vmatpush1.msra.mxu0 0.0
    %454 = vmatprep.mubr.f32.mxu0 0.0
    %455 = vmatmul.mubr.f32.gmra.mrb[0].mxu0 %v317
    %v456 = vpop.f32.mrb[0].mxu0
    %v457 = vadd.f32 %v286, %v456
    %v458 = vpop.f32.mrb[0].mxu0
    %v459 = vadd.f32 %v290, %v458
    %460 = vdwg.mxu0
    %461 = vmatprep.subr.mxu0 %v99
    %462 = vmatpush1.msra.mxu0 %v98
    %463 = vmatprep.subr.mxu0 %v107
    %464 = vmatpush1.msra.mxu0 %v106
    %465 = vmatprep.subr.mxu0 %v115
    %466 = vmatpush1.msra.mxu0 %v114
    %467 = vmatprep.subr.mxu0 %v123
    %468 = vmatpush1.msra.mxu0 %v122
    %469 = vmatprep.subr.mxu0 0.0
    %470 = vmatpush1.msra.mxu0 0.0
    %471 = vmatprep.subr.mxu0 0.0
    %472 = vmatpush1.msra.mxu0 0.0
    %473 = vmatprep.subr.mxu0 0.0
    %474 = vmatpush1.msra.mxu0 0.0
    %475 = vmatprep.subr.mxu0 0.0
    %476 = vmatpush1.msra.mxu0 0.0
    %477 = vmatprep.subr.mxu0 0.0
    %478 = vmatpush1.msra.mxu0 0.0
    %479 = vmatprep.subr.mxu0 0.0
    %480 = vmatpush1.msra.mxu0 0.0
    %481 = vmatprep.subr.mxu0 0.0
    %482 = vmatpush1.msra.mxu0 0.0
    %483 = vmatprep.subr.mxu0 0.0
    %484 = vmatpush1.msra.mxu0 0.0
    %485 = vmatprep.subr.mxu0 0.0
    %486 = vmatpush1.msra.mxu0 0.0
    %487 = vmatprep.subr.mxu0 0.0
    %488 = vmatpush1.msra.mxu0 0.0
    %489 = vmatprep.subr.mxu0 0.0
    %490 = vmatpush1.msra.mxu0 0.0
    %491 = vmatprep.subr.mxu0 0.0
    %492 = vmatpush1.msra.mxu0 0.0
    %493 = vmatprep.subr.mxu0 0.0
    %494 = vmatpush1.msra.mxu0 0.0
    %495 = vmatprep.subr.mxu0 0.0
    %496 = vmatpush1.msra.mxu0 0.0
    %497 = vmatprep.subr.mxu0 0.0
    %498 = vmatpush1.msra.mxu0 0.0
    %499 = vmatprep.subr.mxu0 0.0
    %500 = vmatpush1.msra.mxu0 0.0
    %501 = vmatprep.subr.mxu0 0.0
    %502 = vmatpush1.msra.mxu0 0.0
    %503 = vmatprep.subr.mxu0 0.0
    %504 = vmatpush1.msra.mxu0 0.0
    %505 = vmatprep.subr.mxu0 0.0
    %506 = vmatpush1.msra.mxu0 0.0
    %507 = vmatprep.subr.mxu0 0.0
    %508 = vmatpush1.msra.mxu0 0.0
    %509 = vmatprep.subr.mxu0 0.0
    %510 = vmatpush1.msra.mxu0 0.0
    %511 = vmatprep.subr.mxu0 0.0
    %512 = vmatpush1.msra.mxu0 0.0
    %513 = vmatprep.subr.mxu0 0.0
    %514 = vmatpush1.msra.mxu0 0.0
    %515 = vmatprep.subr.mxu0 0.0
    %516 = vmatpush1.msra.mxu0 0.0
    %517 = vmatprep.subr.mxu0 0.0
    %518 = vmatpush1.msra.mxu0 0.0
    %519 = vmatprep.subr.mxu0 0.0
    %520 = vmatpush1.msra.mxu0 0.0
    %521 = vmatprep.subr.mxu0 0.0
    %522 = vmatpush1.msra.mxu0 0.0
    %523 = vmatprep.subr.mxu0 0.0
    %524 = vmatpush1.msra.mxu0 0.0
    %525 = vmatprep.mubr.f32.mxu0 0.0
    %526 = vmatmul.mubr.f32.gmra.mrb[0].mxu0 %v317
    %v527 = vpop.f32.mrb[0].mxu0
    %v528 = vadd.f32 %v294, %v527
    %v529 = vpop.f32.mrb[0].mxu0
    %v530 = vadd.f32 %v298, %v529
    %531 = vdwg.mxu0
    %532 = vmatprep.subr.mxu0 %v101
    %533 = vmatpush1.msra.mxu0 %v100
    %534 = vmatprep.subr.mxu0 %v109
    %535 = vmatpush1.msra.mxu0 %v108
    %536 = vmatprep.subr.mxu0 %v117
    %537 = vmatpush1.msra.mxu0 %v116
    %538 = vmatprep.subr.mxu0 %v125
    %539 = vmatpush1.msra.mxu0 %v124
    %540 = vmatprep.subr.mxu0 0.0
    %541 = vmatpush1.msra.mxu0 0.0
    %542 = vmatprep.subr.mxu0 0.0
    %543 = vmatpush1.msra.mxu0 0.0
    %544 = vmatprep.subr.mxu0 0.0
    %545 = vmatpush1.msra.mxu0 0.0
    %546 = vmatprep.subr.mxu0 0.0
    %547 = vmatpush1.msra.mxu0 0.0
    %548 = vmatprep.subr.mxu0 0.0
    %549 = vmatpush1.msra.mxu0 0.0
    %550 = vmatprep.subr.mxu0 0.0
    %551 = vmatpush1.msra.mxu0 0.0
    %552 = vmatprep.subr.mxu0 0.0
    %553 = vmatpush1.msra.mxu0 0.0
    %554 = vmatprep.subr.mxu0 0.0
    %555 = vmatpush1.msra.mxu0 0.0
    %556 = vmatprep.subr.mxu0 0.0
    %557 = vmatpush1.msra.mxu0 0.0
    %558 = vmatprep.subr.mxu0 0.0
    %559 = vmatpush1.msra.mxu0 0.0
    %560 = vmatprep.subr.mxu0 0.0
    %561 = vmatpush1.msra.mxu0 0.0
    %562 = vmatprep.subr.mxu0 0.0
    %563 = vmatpush1.msra.mxu0 0.0
    %564 = vmatprep.subr.mxu0 0.0
    %565 = vmatpush1.msra.mxu0 0.0
    %566 = vmatprep.subr.mxu0 0.0
    %567 = vmatpush1.msra.mxu0 0.0
    %568 = vmatprep.subr.mxu0 0.0
    %569 = vmatpush1.msra.mxu0 0.0
    %570 = vmatprep.subr.mxu0 0.0
    %571 = vmatpush1.msra.mxu0 0.0
    %572 = vmatprep.subr.mxu0 0.0
    %573 = vmatpush1.msra.mxu0 0.0
    %574 = vmatprep.subr.mxu0 0.0
    %575 = vmatpush1.msra.mxu0 0.0
    %576 = vmatprep.subr.mxu0 0.0
    %577 = vmatpush1.msra.mxu0 0.0
    %578 = vmatprep.subr.mxu0 0.0
    %579 = vmatpush1.msra.mxu0 0.0
    %580 = vmatprep.subr.mxu0 0.0
    %581 = vmatpush1.msra.mxu0 0.0
    %582 = vmatprep.subr.mxu0 0.0
    %583 = vmatpush1.msra.mxu0 0.0
    %584 = vmatprep.subr.mxu0 0.0
    %585 = vmatpush1.msra.mxu0 0.0
    %586 = vmatprep.subr.mxu0 0.0
    %587 = vmatpush1.msra.mxu0 0.0
    %588 = vmatprep.subr.mxu0 0.0
    %589 = vmatpush1.msra.mxu0 0.0
    %590 = vmatprep.subr.mxu0 0.0
    %591 = vmatpush1.msra.mxu0 0.0
    %592 = vmatprep.subr.mxu0 0.0
    %593 = vmatpush1.msra.mxu0 0.0
    %594 = vmatprep.subr.mxu0 0.0
    %595 = vmatpush1.msra.mxu0 0.0
    %596 = vmatprep.mubr.f32.mxu0 0.0
    %597 = vmatmul.mubr.f32.gmra.mrb[0].mxu0 %v317
    %v598 = vpop.f32.mrb[0].mxu0
    %v599 = vadd.f32 %v302, %v598
    %v600 = vpop.f32.mrb[0].mxu0
    %v601 = vadd.f32 %v306, %v600
    %602 = vdwg.mxu0
    %v603 = vtanh.pop %v386
    %v604 = vtanh.pop %v388
    %v605 = vtanh.pop %v457
    %v606 = vtanh.pop %v459
    %v607 = vtanh.pop %v528
    %v608 = vtanh.pop %v530
    %v609 = vtanh.pop %v599
    %v610 = vtanh.pop %v601
    %v612 = vlaneseq
    %v613 = vshrl.u32 %v612, 7
    %v614 = vsub.s32 0, %v613
    %v615 = vrot.slane %v255, %v614
    %617 = vmatprep.subr.mxu0 0.0
    %618 = vmatpush1.msra.mxu0 %v127
    %619 = vmatprep.subr.mxu0 0.0
    %620 = vmatpush1.msra.mxu0 %v128
    %621 = vmatprep.subr.mxu0 0.0
    %622 = vmatpush1.msra.mxu0 %v129
    %623 = vmatprep.subr.mxu0 0.0
    %624 = vmatpush1.msra.mxu0 %v130
    %625 = vmatprep.subr.mxu0 0.0
    %626 = vmatpush1.msra.mxu0 %v131
    %627 = vmatprep.subr.mxu0 0.0
    %628 = vmatpush1.msra.mxu0 %v132
    %629 = vmatprep.subr.mxu0 0.0
    %630 = vmatpush1.msra.mxu0 %v133
    %631 = vmatprep.subr.mxu0 0.0
    %632 = vmatpush1.msra.mxu0 %v134
    %633 = vmatprep.subr.mxu0 0.0
    %634 = vmatpush1.msra.mxu0 %v135
    %635 = vmatprep.subr.mxu0 0.0
    %636 = vmatpush1.msra.mxu0 %v136
    %637 = vmatprep.subr.mxu0 0.0
    %638 = vmatpush1.msra.mxu0 %v137
    %639 = vmatprep.subr.mxu0 0.0
    %640 = vmatpush1.msra.mxu0 %v138
    %641 = vmatprep.subr.mxu0 0.0
    %642 = vmatpush1.msra.mxu0 %v139
    %643 = vmatprep.subr.mxu0 0.0
    %644 = vmatpush1.msra.mxu0 %v140
    %645 = vmatprep.subr.mxu0 0.0
    %646 = vmatpush1.msra.mxu0 %v141
    %647 = vmatprep.subr.mxu0 0.0
    %648 = vmatpush1.msra.mxu0 %v142
    %649 = vmatprep.subr.mxu0 0.0
    %650 = vmatpush1.msra.mxu0 %v143
    %651 = vmatprep.subr.mxu0 0.0
    %652 = vmatpush1.msra.mxu0 %v144
    %653 = vmatprep.subr.mxu0 0.0
    %654 = vmatpush1.msra.mxu0 %v145
    %655 = vmatprep.subr.mxu0 0.0
    %656 = vmatpush1.msra.mxu0 %v146
    %657 = vmatprep.subr.mxu0 0.0
    %658 = vmatpush1.msra.mxu0 %v147
    %659 = vmatprep.subr.mxu0 0.0
    %660 = vmatpush1.msra.mxu0 %v148
    %661 = vmatprep.subr.mxu0 0.0
    %662 = vmatpush1.msra.mxu0 %v149
    %663 = vmatprep.subr.mxu0 0.0
    %664 = vmatpush1.msra.mxu0 %v150
    %665 = vmatprep.subr.mxu0 0.0
    %666 = vmatpush1.msra.mxu0 %v151
    %667 = vmatprep.subr.mxu0 0.0
    %668 = vmatpush1.msra.mxu0 %v152
    %669 = vmatprep.subr.mxu0 0.0
    %670 = vmatpush1.msra.mxu0 %v153
    %671 = vmatprep.subr.mxu0 0.0
    %672 = vmatpush1.msra.mxu0 %v154
    %673 = vmatprep.subr.mxu0 0.0
    %674 = vmatpush1.msra.mxu0 %v155
    %675 = vmatprep.subr.mxu0 0.0
    %676 = vmatpush1.msra.mxu0 %v156
    %677 = vmatprep.subr.mxu0 0.0
    %678 = vmatpush1.msra.mxu0 %v157
    %679 = vmatprep.subr.mxu0 0.0
    %680 = vmatpush1.msra.mxu0 %v158
    %681 = vmatprep.mubr.f32.mxu0 %v604
    %682 = vmatmul.mubr.f32.gmra.mrb[0].mxu0 %v603
    %v683 = vpop.f32.mrb[0].mxu0
    %v684 = vadd.f32 %v615, %v683
    %v685 = vpop.f32.mrb[0].mxu0
    %686 = vdwg.mxu0
    %687 = vmatprep.subr.mxu0 0.0
    %688 = vmatpush1.msra.mxu0 %v159
    %689 = vmatprep.subr.mxu0 0.0
    %690 = vmatpush1.msra.mxu0 %v160
    %691 = vmatprep.subr.mxu0 0.0
    %692 = vmatpush1.msra.mxu0 %v161
    %693 = vmatprep.subr.mxu0 0.0
    %694 = vmatpush1.msra.mxu0 %v162
    %695 = vmatprep.subr.mxu0 0.0
    %696 = vmatpush1.msra.mxu0 %v163
    %697 = vmatprep.subr.mxu0 0.0
    %698 = vmatpush1.msra.mxu0 %v164
    %699 = vmatprep.subr.mxu0 0.0
    %700 = vmatpush1.msra.mxu0 %v165
    %701 = vmatprep.subr.mxu0 0.0
    %702 = vmatpush1.msra.mxu0 %v166
    %703 = vmatprep.subr.mxu0 0.0
    %704 = vmatpush1.msra.mxu0 %v167
    %705 = vmatprep.subr.mxu0 0.0
    %706 = vmatpush1.msra.mxu0 %v168
    %707 = vmatprep.subr.mxu0 0.0
    %708 = vmatpush1.msra.mxu0 %v169
    %709 = vmatprep.subr.mxu0 0.0
    %710 = vmatpush1.msra.mxu0 %v170
    %711 = vmatprep.subr.mxu0 0.0
    %712 = vmatpush1.msra.mxu0 %v171
    %713 = vmatprep.subr.mxu0 0.0
    %714 = vmatpush1.msra.mxu0 %v172
    %715 = vmatprep.subr.mxu0 0.0
    %716 = vmatpush1.msra.mxu0 %v173
    %717 = vmatprep.subr.mxu0 0.0
    %718 = vmatpush1.msra.mxu0 %v174
    %719 = vmatprep.subr.mxu0 0.0
    %720 = vmatpush1.msra.mxu0 %v175
    %721 = vmatprep.subr.mxu0 0.0
    %722 = vmatpush1.msra.mxu0 %v176
    %723 = vmatprep.subr.mxu0 0.0
    %724 = vmatpush1.msra.mxu0 %v177
    %725 = vmatprep.subr.mxu0 0.0
    %726 = vmatpush1.msra.mxu0 %v178
    %727 = vmatprep.subr.mxu0 0.0
    %728 = vmatpush1.msra.mxu0 %v179
    %729 = vmatprep.subr.mxu0 0.0
    %730 = vmatpush1.msra.mxu0 %v180
    %731 = vmatprep.subr.mxu0 0.0
    %732 = vmatpush1.msra.mxu0 %v181
    %733 = vmatprep.subr.mxu0 0.0
    %734 = vmatpush1.msra.mxu0 %v182
    %735 = vmatprep.subr.mxu0 0.0
    %736 = vmatpush1.msra.mxu0 %v183
    %737 = vmatprep.subr.mxu0 0.0
    %738 = vmatpush1.msra.mxu0 %v184
    %739 = vmatprep.subr.mxu0 0.0
    %740 = vmatpush1.msra.mxu0 %v185
    %741 = vmatprep.subr.mxu0 0.0
    %742 = vmatpush1.msra.mxu0 %v186
    %743 = vmatprep.subr.mxu0 0.0
    %744 = vmatpush1.msra.mxu0 %v187
    %745 = vmatprep.subr.mxu0 0.0
    %746 = vmatpush1.msra.mxu0 %v188
    %747 = vmatprep.subr.mxu0 0.0
    %748 = vmatpush1.msra.mxu0 %v189
    %749 = vmatprep.subr.mxu0 0.0
    %750 = vmatpush1.msra.mxu0 %v190
    %751 = vmatprep.mubr.f32.mxu0 %v606
    %752 = vmatmul.mubr.f32.gmra.mrb[0].mxu0 %v605
    %v753 = vpop.f32.mrb[0].mxu0
    %v754 = vadd.f32 %v684, %v753
    %v755 = vpop.f32.mrb[0].mxu0
    %756 = vdwg.mxu0
    %757 = vmatprep.subr.mxu0 0.0
    %758 = vmatpush1.msra.mxu0 %v191
    %759 = vmatprep.subr.mxu0 0.0
    %760 = vmatpush1.msra.mxu0 %v192
    %761 = vmatprep.subr.mxu0 0.0
    %762 = vmatpush1.msra.mxu0 %v193
    %763 = vmatprep.subr.mxu0 0.0
    %764 = vmatpush1.msra.mxu0 %v194
    %765 = vmatprep.subr.mxu0 0.0
    %766 = vmatpush1.msra.mxu0 %v195
    %767 = vmatprep.subr.mxu0 0.0
    %768 = vmatpush1.msra.mxu0 %v196
    %769 = vmatprep.subr.mxu0 0.0
    %770 = vmatpush1.msra.mxu0 %v197
    %771 = vmatprep.subr.mxu0 0.0
    %772 = vmatpush1.msra.mxu0 %v198
    %773 = vmatprep.subr.mxu0 0.0
    %774 = vmatpush1.msra.mxu0 %v199
    %775 = vmatprep.subr.mxu0 0.0
    %776 = vmatpush1.msra.mxu0 %v200
    %777 = vmatprep.subr.mxu0 0.0
    %778 = vmatpush1.msra.mxu0 %v201
    %779 = vmatprep.subr.mxu0 0.0
    %780 = vmatpush1.msra.mxu0 %v202
    %781 = vmatprep.subr.mxu0 0.0
    %782 = vmatpush1.msra.mxu0 %v203
    %783 = vmatprep.subr.mxu0 0.0
    %784 = vmatpush1.msra.mxu0 %v204
    %785 = vmatprep.subr.mxu0 0.0
    %786 = vmatpush1.msra.mxu0 %v205
    %787 = vmatprep.subr.mxu0 0.0
    %788 = vmatpush1.msra.mxu0 %v206
    %789 = vmatprep.subr.mxu0 0.0
    %790 = vmatpush1.msra.mxu0 %v207
    %791 = vmatprep.subr.mxu0 0.0
    %792 = vmatpush1.msra.mxu0 %v208
    %793 = vmatprep.subr.mxu0 0.0
    %794 = vmatpush1.msra.mxu0 %v209
    %795 = vmatprep.subr.mxu0 0.0
    %796 = vmatpush1.msra.mxu0 %v210
    %797 = vmatprep.subr.mxu0 0.0
    %798 = vmatpush1.msra.mxu0 %v211
    %799 = vmatprep.subr.mxu0 0.0
    %800 = vmatpush1.msra.mxu0 %v212
    %801 = vmatprep.subr.mxu0 0.0
    %802 = vmatpush1.msra.mxu0 %v213
    %803 = vmatprep.subr.mxu0 0.0
    %804 = vmatpush1.msra.mxu0 %v214
    %805 = vmatprep.subr.mxu0 0.0
    %806 = vmatpush1.msra.mxu0 %v215
    %807 = vmatprep.subr.mxu0 0.0
    %808 = vmatpush1.msra.mxu0 %v216
    %809 = vmatprep.subr.mxu0 0.0
    %810 = vmatpush1.msra.mxu0 %v217
    %811 = vmatprep.subr.mxu0 0.0
    %812 = vmatpush1.msra.mxu0 %v218
    %813 = vmatprep.subr.mxu0 0.0
    %814 = vmatpush1.msra.mxu0 %v219
    %815 = vmatprep.subr.mxu0 0.0
    %816 = vmatpush1.msra.mxu0 %v220
    %817 = vmatprep.subr.mxu0 0.0
    %818 = vmatpush1.msra.mxu0 %v221
    %819 = vmatprep.subr.mxu0 0.0
    %820 = vmatpush1.msra.mxu0 %v222
    %821 = vmatprep.mubr.f32.mxu0 %v608
    %822 = vmatmul.mubr.f32.gmra.mrb[0].mxu0 %v607
    %v823 = vpop.f32.mrb[0].mxu0
    %v824 = vadd.f32 %v754, %v823
    %v825 = vpop.f32.mrb[0].mxu0
    %826 = vdwg.mxu0
    %827 = vmatprep.subr.mxu0 0.0
    %828 = vmatpush1.msra.mxu0 %v223
    %829 = vmatprep.subr.mxu0 0.0
    %830 = vmatpush1.msra.mxu0 %v224
    %831 = vmatprep.subr.mxu0 0.0
    %832 = vmatpush1.msra.mxu0 %v225
    %833 = vmatprep.subr.mxu0 0.0
    %834 = vmatpush1.msra.mxu0 %v226
    %835 = vmatprep.subr.mxu0 0.0
    %836 = vmatpush1.msra.mxu0 %v227
    %837 = vmatprep.subr.mxu0 0.0
    %838 = vmatpush1.msra.mxu0 %v228
    %839 = vmatprep.subr.mxu0 0.0
    %840 = vmatpush1.msra.mxu0 %v229
    %841 = vmatprep.subr.mxu0 0.0
    %842 = vmatpush1.msra.mxu0 %v230
    %843 = vmatprep.subr.mxu0 0.0
    %844 = vmatpush1.msra.mxu0 %v231
    %845 = vmatprep.subr.mxu0 0.0
    %846 = vmatpush1.msra.mxu0 %v232
    %847 = vmatprep.subr.mxu0 0.0
    %848 = vmatpush1.msra.mxu0 %v233
    %849 = vmatprep.subr.mxu0 0.0
    %850 = vmatpush1.msra.mxu0 %v234
    %851 = vmatprep.subr.mxu0 0.0
    %852 = vmatpush1.msra.mxu0 %v235
    %853 = vmatprep.subr.mxu0 0.0
    %854 = vmatpush1.msra.mxu0 %v236
    %855 = vmatprep.subr.mxu0 0.0
    %856 = vmatpush1.msra.mxu0 %v237
    %857 = vmatprep.subr.mxu0 0.0
    %858 = vmatpush1.msra.mxu0 %v238
    %859 = vmatprep.subr.mxu0 0.0
    %860 = vmatpush1.msra.mxu0 %v239
    %861 = vmatprep.subr.mxu0 0.0
    %862 = vmatpush1.msra.mxu0 %v240
    %863 = vmatprep.subr.mxu0 0.0
    %864 = vmatpush1.msra.mxu0 %v241
    %865 = vmatprep.subr.mxu0 0.0
    %866 = vmatpush1.msra.mxu0 %v242
    %867 = vmatprep.subr.mxu0 0.0
    %868 = vmatpush1.msra.mxu0 %v243
    %869 = vmatprep.subr.mxu0 0.0
    %870 = vmatpush1.msra.mxu0 %v244
    %871 = vmatprep.subr.mxu0 0.0
    %872 = vmatpush1.msra.mxu0 %v245
    %873 = vmatprep.subr.mxu0 0.0
    %874 = vmatpush1.msra.mxu0 %v246
    %875 = vmatprep.subr.mxu0 0.0
    %876 = vmatpush1.msra.mxu0 %v247
    %877 = vmatprep.subr.mxu0 0.0
    %878 = vmatpush1.msra.mxu0 %v248
    %879 = vmatprep.subr.mxu0 0.0
    %880 = vmatpush1.msra.mxu0 %v249
    %881 = vmatprep.subr.mxu0 0.0
    %882 = vmatpush1.msra.mxu0 %v250
    %883 = vmatprep.subr.mxu0 0.0
    %884 = vmatpush1.msra.mxu0 %v251
    %885 = vmatprep.subr.mxu0 0.0
    %886 = vmatpush1.msra.mxu0 %v252
    %887 = vmatprep.subr.mxu0 0.0
    %888 = vmatpush1.msra.mxu0 %v253
    %889 = vmatprep.subr.mxu0 0.0
    %890 = vmatpush1.msra.mxu0 %v254
    %891 = vmatprep.mubr.f32.mxu0 %v610
    %892 = vmatmul.mubr.f32.gmra.mrb[0].mxu0 %v609
    %v893 = vpop.f32.mrb[0].mxu0
    %v894 = vadd.f32 %v824, %v893
    %v895 = vpop.f32.mrb[0].mxu0
    %896 = vdwg.mxu0
    %v899 = vcombine.high %v90, %v90
    %v901 = vunpack.c.l.s4 1983009808
    %v902 = vunpack.c.0.s8 %v901
    %v903 = vlaneseq
    %v904 = vshrl.u32 %v903, 7
    %v905 = vsub.s32 %v902, %v904
    %v906 = vrot.slane %v90, %v905
    %v908 = vunpack.c.l.s4 1983009808
    %v909 = vunpack.c.0.s8 %v908
    %v910 = vlaneseq
    %v911 = vshrl.u32 %v910, 7
    %v912 = vsub.s32 %v909, %v911
    %v913 = vrot.slane %v899, %v912
    %v914 = vcombine.high %v906, %v906
    %v915 = vcombine.high %v913, %v913
    %v916 = vcombine.high %v91, %v91
    %v918 = vunpack.c.l.s4 1983009808
    %v919 = vunpack.c.0.s8 %v918
    %v920 = vlaneseq
    %v921 = vshrl.u32 %v920, 7
    %v922 = vsub.s32 %v919, %v921
    %v923 = vrot.slane %v91, %v922
    %v925 = vunpack.c.l.s4 1983009808
    %v926 = vunpack.c.0.s8 %v925
    %v927 = vlaneseq
    %v928 = vshrl.u32 %v927, 7
    %v929 = vsub.s32 %v926, %v928
    %v930 = vrot.slane %v916, %v929
    %v931 = vcombine.high %v923, %v923
    %v932 = vcombine.high %v930, %v930
    %941 = vmatprep.subr.mxu0 0.0
    %942 = vmatpush1.msra.mxu0 %v127
    %943 = vmatprep.subr.mxu0 0.0
    %944 = vmatpush1.msra.mxu0 %v128
    %945 = vmatprep.subr.mxu0 0.0
    %946 = vmatpush1.msra.mxu0 %v129
    %947 = vmatprep.subr.mxu0 0.0
    %948 = vmatpush1.msra.mxu0 %v130
    %949 = vmatprep.subr.mxu0 0.0
    %950 = vmatpush1.msra.mxu0 %v131
    %951 = vmatprep.subr.mxu0 0.0
    %952 = vmatpush1.msra.mxu0 %v132
    %953 = vmatprep.subr.mxu0 0.0
    %954 = vmatpush1.msra.mxu0 %v133
    %955 = vmatprep.subr.mxu0 0.0
    %956 = vmatpush1.msra.mxu0 %v134
    %957 = vmatprep.subr.mxu0 0.0
    %958 = vmatpush1.msra.mxu0 %v135
    %959 = vmatprep.subr.mxu0 0.0
    %960 = vmatpush1.msra.mxu0 %v136
    %961 = vmatprep.subr.mxu0 0.0
    %962 = vmatpush1.msra.mxu0 %v137
    %963 = vmatprep.subr.mxu0 0.0
    %964 = vmatpush1.msra.mxu0 %v138
    %965 = vmatprep.subr.mxu0 0.0
    %966 = vmatpush1.msra.mxu0 %v139
    %967 = vmatprep.subr.mxu0 0.0
    %968 = vmatpush1.msra.mxu0 %v140
    %969 = vmatprep.subr.mxu0 0.0
    %970 = vmatpush1.msra.mxu0 %v141
    %971 = vmatprep.subr.mxu0 0.0
    %972 = vmatpush1.msra.mxu0 %v142
    %973 = vmatprep.subr.mxu0 0.0
    %974 = vmatpush1.msra.mxu0 %v143
    %975 = vmatprep.subr.mxu0 0.0
    %976 = vmatpush1.msra.mxu0 %v144
    %977 = vmatprep.subr.mxu0 0.0
    %978 = vmatpush1.msra.mxu0 %v145
    %979 = vmatprep.subr.mxu0 0.0
    %980 = vmatpush1.msra.mxu0 %v146
    %981 = vmatprep.subr.mxu0 0.0
    %982 = vmatpush1.msra.mxu0 %v147
    %983 = vmatprep.subr.mxu0 0.0
    %984 = vmatpush1.msra.mxu0 %v148
    %985 = vmatprep.subr.mxu0 0.0
    %986 = vmatpush1.msra.mxu0 %v149
    %987 = vmatprep.subr.mxu0 0.0
    %988 = vmatpush1.msra.mxu0 %v150
    %989 = vmatprep.subr.mxu0 0.0
    %990 = vmatpush1.msra.mxu0 %v151
    %991 = vmatprep.subr.mxu0 0.0
    %992 = vmatpush1.msra.mxu0 %v152
    %993 = vmatprep.subr.mxu0 0.0
    %994 = vmatpush1.msra.mxu0 %v153
    %995 = vmatprep.subr.mxu0 0.0
    %996 = vmatpush1.msra.mxu0 %v154
    %997 = vmatprep.subr.mxu0 0.0
    %998 = vmatpush1.msra.mxu0 %v155
    %999 = vmatprep.subr.mxu0 0.0
    %1000 = vmatpush1.msra.mxu0 %v156
    %1001 = vmatprep.subr.mxu0 0.0
    %1002 = vmatpush1.msra.mxu0 %v157
    %1003 = vmatprep.subr.mxu0 0.0
    %1004 = vmatpush1.msra.mxu0 %v158
    %1005 = vmatprep.mubr.f32.mxu0 %v914
    %1006 = vmatmul.mubr.f32.gmra.mrb[0].mxu0 %v906
    %v1007 = vpop.f32.mrb[0].mxu0
    %v1008 = vadd.f32 %v615, %v1007
    %v1009 = vpop.f32.mrb[0].mxu0
    %1010 = vdwg.mxu0
    %1011 = vmatprep.subr.mxu0 0.0
    %1012 = vmatpush1.msra.mxu0 %v159
    %1013 = vmatprep.subr.mxu0 0.0
    %1014 = vmatpush1.msra.mxu0 %v160
    %1015 = vmatprep.subr.mxu0 0.0
    %1016 = vmatpush1.msra.mxu0 %v161
    %1017 = vmatprep.subr.mxu0 0.0
    %1018 = vmatpush1.msra.mxu0 %v162
    %1019 = vmatprep.subr.mxu0 0.0
    %1020 = vmatpush1.msra.mxu0 %v163
    %1021 = vmatprep.subr.mxu0 0.0
    %1022 = vmatpush1.msra.mxu0 %v164
    %1023 = vmatprep.subr.mxu0 0.0
    %1024 = vmatpush1.msra.mxu0 %v165
    %1025 = vmatprep.subr.mxu0 0.0
    %1026 = vmatpush1.msra.mxu0 %v166
    %1027 = vmatprep.subr.mxu0 0.0
    %1028 = vmatpush1.msra.mxu0 %v167
    %1029 = vmatprep.subr.mxu0 0.0
    %1030 = vmatpush1.msra.mxu0 %v168
    %1031 = vmatprep.subr.mxu0 0.0
    %1032 = vmatpush1.msra.mxu0 %v169
    %1033 = vmatprep.subr.mxu0 0.0
    %1034 = vmatpush1.msra.mxu0 %v170
    %1035 = vmatprep.subr.mxu0 0.0
    %1036 = vmatpush1.msra.mxu0 %v171
    %1037 = vmatprep.subr.mxu0 0.0
    %1038 = vmatpush1.msra.mxu0 %v172
    %1039 = vmatprep.subr.mxu0 0.0
    %1040 = vmatpush1.msra.mxu0 %v173
    %1041 = vmatprep.subr.mxu0 0.0
    %1042 = vmatpush1.msra.mxu0 %v174
    %1043 = vmatprep.subr.mxu0 0.0
    %1044 = vmatpush1.msra.mxu0 %v175
    %1045 = vmatprep.subr.mxu0 0.0
    %1046 = vmatpush1.msra.mxu0 %v176
    %1047 = vmatprep.subr.mxu0 0.0
    %1048 = vmatpush1.msra.mxu0 %v177
    %1049 = vmatprep.subr.mxu0 0.0
    %1050 = vmatpush1.msra.mxu0 %v178
    %1051 = vmatprep.subr.mxu0 0.0
    %1052 = vmatpush1.msra.mxu0 %v179
    %1053 = vmatprep.subr.mxu0 0.0
    %1054 = vmatpush1.msra.mxu0 %v180
    %1055 = vmatprep.subr.mxu0 0.0
    %1056 = vmatpush1.msra.mxu0 %v181
    %1057 = vmatprep.subr.mxu0 0.0
    %1058 = vmatpush1.msra.mxu0 %v182
    %1059 = vmatprep.subr.mxu0 0.0
    %1060 = vmatpush1.msra.mxu0 %v183
    %1061 = vmatprep.subr.mxu0 0.0
    %1062 = vmatpush1.msra.mxu0 %v184
    %1063 = vmatprep.subr.mxu0 0.0
    %1064 = vmatpush1.msra.mxu0 %v185
    %1065 = vmatprep.subr.mxu0 0.0
    %1066 = vmatpush1.msra.mxu0 %v186
    %1067 = vmatprep.subr.mxu0 0.0
    %1068 = vmatpush1.msra.mxu0 %v187
    %1069 = vmatprep.subr.mxu0 0.0
    %1070 = vmatpush1.msra.mxu0 %v188
    %1071 = vmatprep.subr.mxu0 0.0
    %1072 = vmatpush1.msra.mxu0 %v189
    %1073 = vmatprep.subr.mxu0 0.0
    %1074 = vmatpush1.msra.mxu0 %v190
    %1075 = vmatprep.mubr.f32.mxu0 %v915
    %1076 = vmatmul.mubr.f32.gmra.mrb[0].mxu0 %v913
    %v1077 = vpop.f32.mrb[0].mxu0
    %v1078 = vadd.f32 %v1008, %v1077
    %v1079 = vpop.f32.mrb[0].mxu0
    %1080 = vdwg.mxu0
    %1081 = vmatprep.subr.mxu0 0.0
    %1082 = vmatpush1.msra.mxu0 %v191
    %1083 = vmatprep.subr.mxu0 0.0
    %1084 = vmatpush1.msra.mxu0 %v192
    %1085 = vmatprep.subr.mxu0 0.0
    %1086 = vmatpush1.msra.mxu0 %v193
    %1087 = vmatprep.subr.mxu0 0.0
    %1088 = vmatpush1.msra.mxu0 %v194
    %1089 = vmatprep.subr.mxu0 0.0
    %1090 = vmatpush1.msra.mxu0 %v195
    %1091 = vmatprep.subr.mxu0 0.0
    %1092 = vmatpush1.msra.mxu0 %v196
    %1093 = vmatprep.subr.mxu0 0.0
    %1094 = vmatpush1.msra.mxu0 %v197
    %1095 = vmatprep.subr.mxu0 0.0
    %1096 = vmatpush1.msra.mxu0 %v198
    %1097 = vmatprep.subr.mxu0 0.0
    %1098 = vmatpush1.msra.mxu0 %v199
    %1099 = vmatprep.subr.mxu0 0.0
    %1100 = vmatpush1.msra.mxu0 %v200
    %1101 = vmatprep.subr.mxu0 0.0
    %1102 = vmatpush1.msra.mxu0 %v201
    %1103 = vmatprep.subr.mxu0 0.0
    %1104 = vmatpush1.msra.mxu0 %v202
    %1105 = vmatprep.subr.mxu0 0.0
    %1106 = vmatpush1.msra.mxu0 %v203
    %1107 = vmatprep.subr.mxu0 0.0
    %1108 = vmatpush1.msra.mxu0 %v204
    %1109 = vmatprep.subr.mxu0 0.0
    %1110 = vmatpush1.msra.mxu0 %v205
    %1111 = vmatprep.subr.mxu0 0.0
    %1112 = vmatpush1.msra.mxu0 %v206
    %1113 = vmatprep.subr.mxu0 0.0
    %1114 = vmatpush1.msra.mxu0 %v207
    %1115 = vmatprep.subr.mxu0 0.0
    %1116 = vmatpush1.msra.mxu0 %v208
    %1117 = vmatprep.subr.mxu0 0.0
    %1118 = vmatpush1.msra.mxu0 %v209
    %1119 = vmatprep.subr.mxu0 0.0
    %1120 = vmatpush1.msra.mxu0 %v210
    %1121 = vmatprep.subr.mxu0 0.0
    %1122 = vmatpush1.msra.mxu0 %v211
    %1123 = vmatprep.subr.mxu0 0.0
    %1124 = vmatpush1.msra.mxu0 %v212
    %1125 = vmatprep.subr.mxu0 0.0
    %1126 = vmatpush1.msra.mxu0 %v213
    %1127 = vmatprep.subr.mxu0 0.0
    %1128 = vmatpush1.msra.mxu0 %v214
    %1129 = vmatprep.subr.mxu0 0.0
    %1130 = vmatpush1.msra.mxu0 %v215
    %1131 = vmatprep.subr.mxu0 0.0
    %1132 = vmatpush1.msra.mxu0 %v216
    %1133 = vmatprep.subr.mxu0 0.0
    %1134 = vmatpush1.msra.mxu0 %v217
    %1135 = vmatprep.subr.mxu0 0.0
    %1136 = vmatpush1.msra.mxu0 %v218
    %1137 = vmatprep.subr.mxu0 0.0
    %1138 = vmatpush1.msra.mxu0 %v219
    %1139 = vmatprep.subr.mxu0 0.0
    %1140 = vmatpush1.msra.mxu0 %v220
    %1141 = vmatprep.subr.mxu0 0.0
    %1142 = vmatpush1.msra.mxu0 %v221
    %1143 = vmatprep.subr.mxu0 0.0
    %1144 = vmatpush1.msra.mxu0 %v222
    %1145 = vmatprep.mubr.f32.mxu0 %v931
    %1146 = vmatmul.mubr.f32.gmra.mrb[0].mxu0 %v923
    %v1147 = vpop.f32.mrb[0].mxu0
    %v1148 = vadd.f32 %v1078, %v1147
    %v1149 = vpop.f32.mrb[0].mxu0
    %1150 = vdwg.mxu0
    %1151 = vmatprep.subr.mxu0 0.0
    %1152 = vmatpush1.msra.mxu0 %v223
    %1153 = vmatprep.subr.mxu0 0.0
    %1154 = vmatpush1.msra.mxu0 %v224
    %1155 = vmatprep.subr.mxu0 0.0
    %1156 = vmatpush1.msra.mxu0 %v225
    %1157 = vmatprep.subr.mxu0 0.0
    %1158 = vmatpush1.msra.mxu0 %v226
    %1159 = vmatprep.subr.mxu0 0.0
    %1160 = vmatpush1.msra.mxu0 %v227
    %1161 = vmatprep.subr.mxu0 0.0
    %1162 = vmatpush1.msra.mxu0 %v228
    %1163 = vmatprep.subr.mxu0 0.0
    %1164 = vmatpush1.msra.mxu0 %v229
    %1165 = vmatprep.subr.mxu0 0.0
    %1166 = vmatpush1.msra.mxu0 %v230
    %1167 = vmatprep.subr.mxu0 0.0
    %1168 = vmatpush1.msra.mxu0 %v231
    %1169 = vmatprep.subr.mxu0 0.0
    %1170 = vmatpush1.msra.mxu0 %v232
    %1171 = vmatprep.subr.mxu0 0.0
    %1172 = vmatpush1.msra.mxu0 %v233
    %1173 = vmatprep.subr.mxu0 0.0
    %1174 = vmatpush1.msra.mxu0 %v234
    %1175 = vmatprep.subr.mxu0 0.0
    %1176 = vmatpush1.msra.mxu0 %v235
    %1177 = vmatprep.subr.mxu0 0.0
    %1178 = vmatpush1.msra.mxu0 %v236
    %1179 = vmatprep.subr.mxu0 0.0
    %1180 = vmatpush1.msra.mxu0 %v237
    %1181 = vmatprep.subr.mxu0 0.0
    %1182 = vmatpush1.msra.mxu0 %v238
    %1183 = vmatprep.subr.mxu0 0.0
    %1184 = vmatpush1.msra.mxu0 %v239
    %1185 = vmatprep.subr.mxu0 0.0
    %1186 = vmatpush1.msra.mxu0 %v240
    %1187 = vmatprep.subr.mxu0 0.0
    %1188 = vmatpush1.msra.mxu0 %v241
    %1189 = vmatprep.subr.mxu0 0.0
    %1190 = vmatpush1.msra.mxu0 %v242
    %1191 = vmatprep.subr.mxu0 0.0
    %1192 = vmatpush1.msra.mxu0 %v243
    %1193 = vmatprep.subr.mxu0 0.0
    %1194 = vmatpush1.msra.mxu0 %v244
    %1195 = vmatprep.subr.mxu0 0.0
    %1196 = vmatpush1.msra.mxu0 %v245
    %1197 = vmatprep.subr.mxu0 0.0
    %1198 = vmatpush1.msra.mxu0 %v246
    %1199 = vmatprep.subr.mxu0 0.0
    %1200 = vmatpush1.msra.mxu0 %v247
    %1201 = vmatprep.subr.mxu0 0.0
    %1202 = vmatpush1.msra.mxu0 %v248
    %1203 = vmatprep.subr.mxu0 0.0
    %1204 = vmatpush1.msra.mxu0 %v249
    %1205 = vmatprep.subr.mxu0 0.0
    %1206 = vmatpush1.msra.mxu0 %v250
    %1207 = vmatprep.subr.mxu0 0.0
    %1208 = vmatpush1.msra.mxu0 %v251
    %1209 = vmatprep.subr.mxu0 0.0
    %1210 = vmatpush1.msra.mxu0 %v252
    %1211 = vmatprep.subr.mxu0 0.0
    %1212 = vmatpush1.msra.mxu0 %v253
    %1213 = vmatprep.subr.mxu0 0.0
    %1214 = vmatpush1.msra.mxu0 %v254
    %1215 = vmatprep.mubr.f32.mxu0 %v932
    %1216 = vmatmul.mubr.f32.gmra.mrb[0].mxu0 %v930
    %v1217 = vpop.f32.mrb[0].mxu0
    %v1218 = vadd.f32 %v1148, %v1217
    %v1219 = vpop.f32.mrb[0].mxu0
    %1220 = vdwg.mxu0
    %v1221 = vmax.f32 %v894, 0.0
    %v1223 = vlaneseq
    %v1224 = vshrl.u32 %v1223, 7
    %v1225 = vsub.s32 0, %v1224
    %v1226 = vrot.slane %v256, %v1225
    %v1228 = vmul.f32 %v1221, %v1226
    %vm1229 = vcmask 1041408
    %v1230 = vsel %vm1229, %v1228, 0.0
    %1231 = vadd.xlane.f32.xlu0 %v1230
    %v1232 = vpop.xlane.xlu0 %1231
    %v1233 = vstv %s273
    %v1234 = vadd.f32 %v1232, %v1233
    %v1235 = vmax.f32 %v1218, 0.0
    %v1236 = vmul.f32 %v1235, %v1226
    %v1237 = vsel %vm1229, %v1236, 0.0
    %1238 = vadd.xlane.f32.xlu0 %v1237
    %v1239 = vpop.xlane.xlu0 %1238
    %v1240 = vadd.f32 %v1239, %v1233
    %v1241 = vsub.f32 %v1234, %v1240
    %vm1242 = vcmask 1024
    %v1243 = vsel %vm1242, %v1241, 0.0
    %1244 = vadd.xlane.f32.xlu0 %v1243
    %v1245 = vpop.xlane.xlu0 %1244
    %v1246 = vrot.slane %v1245, 4
    %v1247 = vadd.f32 %v1245, %v1246
    %v1248 = vrot.slane %v1247, 2
    %v1249 = vadd.f32 %v1247, %v1248
    %v1250 = vrot.slane %v1249, 1
    %v1251 = vadd.f32 %v1249, %v1250
    %s1252 = vtos %v1251
    %v1253 = vrcp.pop 2.0
    %s1254 = vtos %v1253
    %s1255 = smul.f32 %s1252, %s1254
    %1257 = vset.pattern.permute.xlu0 0
    %1258 = vperm.xlu0 %1257, %v93
    %v1259 = vpop.permute.xlu0 %1258
    %v1261 = vmul.f32 %v1259, %v1218
    %v1262 = vsub.f32 1.0, %v93
    %1264 = vset.pattern.permute.xlu0 0
    %1265 = vperm.xlu0 %1264, %v1262
    %v1266 = vpop.permute.xlu0 %1265
    %v1268 = vmul.f32 %v1266, %v894
    %v1269 = vadd.f32 %v1261, %v1268
    %vm1270 = vcmp.gt.f32.partialorder %v1269, 0.0
    %v1271 = vsel %vm1270, %v1226, 0.0
    %1272 = vmatprep.subr.mxu0 0.0
    %1273 = vmatpush1.msra.mxu0 %v257
    %1274 = vmatprep.subr.mxu0 0.0
    %1275 = vmatpush1.msra.mxu0 %v258
    %1276 = vmatprep.subr.mxu0 0.0
    %1277 = vmatpush1.msra.mxu0 %v259
    %1278 = vmatprep.subr.mxu0 0.0
    %1279 = vmatpush1.msra.mxu0 %v260
    %1280 = vmatprep.subr.mxu0 0.0
    %1281 = vmatpush1.msra.mxu0 %v261
    %1282 = vmatprep.subr.mxu0 0.0
    %1283 = vmatpush1.msra.mxu0 %v262
    %1284 = vmatprep.subr.mxu0 0.0
    %1285 = vmatpush1.msra.mxu0 %v263
    %1286 = vmatprep.subr.mxu0 0.0
    %1287 = vmatpush1.msra.mxu0 %v264
    %1288 = vmatprep.subr.mxu0 0.0
    %1289 = vmatpush1.msra.mxu0 %v265
    %1290 = vmatprep.subr.mxu0 0.0
    %1291 = vmatpush1.msra.mxu0 %v266
    %1292 = vmatprep.subr.mxu0 0.0
    %1293 = vmatpush1.msra.mxu0 %v267
    %1294 = vmatprep.subr.mxu0 0.0
    %1295 = vmatpush1.msra.mxu0 %v268
    %1296 = vmatprep.subr.mxu0 0.0
    %1297 = vmatpush1.msra.mxu0 %v269
    %1298 = vmatprep.subr.mxu0 0.0
    %1299 = vmatpush1.msra.mxu0 %v270
    %1300 = vmatprep.subr.mxu0 0.0
    %1301 = vmatpush1.msra.mxu0 %v271
    %1302 = vmatprep.subr.mxu0 0.0
    %1303 = vmatpush1.msra.mxu0 %v272
    %1304 = vmatprep.subr.mxu0 0.0
    %1305 = vmatpush1.msra.mxu0 0.0
    %1306 = vmatprep.subr.mxu0 0.0
    %1307 = vmatpush1.msra.mxu0 0.0
    %1308 = vmatprep.subr.mxu0 0.0
    %1309 = vmatpush1.msra.mxu0 0.0
    %1310 = vmatprep.subr.mxu0 0.0
    %1311 = vmatpush1.msra.mxu0 0.0
    %1312 = vmatprep.subr.mxu0 0.0
    %1313 = vmatpush1.msra.mxu0 0.0
    %1314 = vmatprep.subr.mxu0 0.0
    %1315 = vmatpush1.msra.mxu0 0.0
    %1316 = vmatprep.subr.mxu0 0.0
    %1317 = vmatpush1.msra.mxu0 0.0
    %1318 = vmatprep.subr.mxu0 0.0
    %1319 = vmatpush1.msra.mxu0 0.0
    %1320 = vmatprep.subr.mxu0 0.0
    %1321 = vmatpush1.msra.mxu0 0.0
    %1322 = vmatprep.subr.mxu0 0.0
    %1323 = vmatpush1.msra.mxu0 0.0
    %1324 = vmatprep.subr.mxu0 0.0
    %1325 = vmatpush1.msra.mxu0 0.0
    %1326 = vmatprep.subr.mxu0 0.0
    %1327 = vmatpush1.msra.mxu0 0.0
    %1328 = vmatprep.subr.mxu0 0.0
    %1329 = vmatpush1.msra.mxu0 0.0
    %1330 = vmatprep.subr.mxu0 0.0
    %1331 = vmatpush1.msra.mxu0 0.0
    %1332 = vmatprep.subr.mxu0 0.0
    %1333 = vmatpush1.msra.mxu0 0.0
    %1334 = vmatprep.subr.mxu0 0.0
    %1335 = vmatpush1.msra.mxu0 0.0
    %1336 = vmatprep.mubr.f32.mxu0 0.0
    %1337 = vmatmul.mubr.f32.gmra.mrb[0].mxu0 %v1271
    %v1338 = vpop.f32.mrb[0].mxu0
    %v1339 = vadd.f32 0.0, %v1338
    %v1340 = vpop.f32.mrb[0].mxu0
    %1341 = vdwg.mxu0
    %v1342 = vmul.f32 %v1271, %v1339
    %v1343 = vsel %vm1229, %v1342, 0.0
    %1344 = vadd.xlane.f32.xlu0 %v1343
    %v1345 = vpop.xlane.xlu0 %1344
    %v1346 = vrsqrt.pop %v1345
    %v1347 = vmul.f32 %v1345, %v1346
    %vm1348 = vcmp.eq.f32.partialorder %v1345, inf
    %v1349 = vsel %vm1348, %v1345, %v1347
    %vm1350 = vcmp.eq.f32.partialorder %v1345, 0.0
    %v1351 = vand.u32 %v1345, 2147483648
    %v1352 = vsel %vm1350, %v1351, %v1349
    %v1353 = vsub.f32 %v1352, 1.0
    %v1354 = vmul.f32 %v1353, %v1353
    %v1355 = vsel %vm1242, %v1354, 0.0
    %1356 = vadd.xlane.f32.xlu0 %v1355
    %v1357 = vpop.xlane.xlu0 %1356
    %v1358 = vrot.slane %v1357, 4
    %v1359 = vadd.f32 %v1357, %v1358
    %v1360 = vrot.slane %v1359, 2
    %v1361 = vadd.f32 %v1359, %v1360
    %v1362 = vrot.slane %v1361, 1
    %v1363 = vadd.f32 %v1361, %v1362
    %s1364 = vtos %v1363
    %v1365 = vrcp.pop 2.0
    %s1366 = vtos %v1365
    %s1367 = smul.f32 %s1364, %s1366
    %s1368 = smul.f32 %s1367, 10.0
    %s1369 = sadd.f32 %s1255, %s1368
    %s1370 = scalar_lea.smem [#allocation11], 0
    %1371 = sst [smem:[%s1370]] %s1369
    // Predicated region
    $region58: #{tpu_custom_call.1} parent=1 // pred_check
      _
    $region59: #{tpu_custom_call.1} parent=1 // pred_check_branch
      %1373 = sbr.rel (0) target = $region61
    $region60: #{tpu_custom_call.1} parent=1 // pred_region
      %s1375 = ssub.s32 16, 16
      %1376 = vsyncadd [#allocation5], %s1375
      %1379 = dma.smem_to_hbm [#allocation11], 16, %s10, [#allocation5]
    $region61: #{tpu_custom_call.1} parent=1 // pred_fallthru
      _
    // Predicated region
    $region62: #{tpu_custom_call.1} parent=1 // pred_check
      _
    $region63: #{tpu_custom_call.1} parent=1 // pred_check_branch
      %1381 = sbr.rel (0) target = $region65
    $region64: #{tpu_custom_call.1} parent=1 // pred_region
      %1382 = dma.done [#allocation5], 16
    $region65: #{tpu_custom_call.1} parent=1 // pred_fallthru
      _
    %1383 = sfence
    %1384 = vsyncpa [#allocation4], 1
    %1385 = vsyncpa [#allocation7], 1
    %1386 = vsyncpa [#allocation10], 1
    %1387 = vsyncpa [#allocation5], 1

</llo_original>
